<compile_context>
chip_gen: v6e
topology: v6e:2x2x1
jax: 0.10.0
libtpu: 0.0.40
codegen_flags: <defaults>
</compile_context>

<pallas_src>
import jax
import jax.numpy as jnp
from jax import lax
from jax.experimental import pallas as pl
from jax.experimental.pallas import tpu as pltpu

CLIP_MEAN = jnp.array([0.48145466, 0.4578275, 0.40821073], dtype=jnp.float32)
CLIP_STD = jnp.array([0.26862954, 0.26130258, 0.27577711], dtype=jnp.float32)

RESIZE = 224                       # transforms.Resize((224, 224)) in the module
PATCH = 32                         # synthetic patch size for the stand-in encoder
EMBED_DIM = 32                     # synthetic CLIP embedding width (small, per instructions)
LANE = 128                         # TPU lane width; embedding dim is zero-padded to this
N_PATCH = (RESIZE // PATCH) ** 2   # 49 patches per image
K_DIM = 3 * PATCH * PATCH          # 3072 flattened patch features (c, ph, pw)


# ----------------------------- Pallas kernel -----------------------------

def _clip_fused_kernel(p_ref, w_ref, b_ref, t_ref, o_ref):
    """Fused per-image CLIP score.

    p_ref: (1, P, K)   raw resized patches of one image, rows in (c, ph, pw) order
    w_ref: (K, Dp)     patch-embed weights with channel normalization folded in (zero-padded)
    b_ref: (1, Dp)     folded channel-normalization bias
    t_ref: (Dp, T)     text features: L2-normalized, x100, transposed, zero-padded
    o_ref: (1, 1, Dp)  class-0 probability for this image, broadcast over lanes
    """
    # TODO(synk): model.encode_image is an external pretrained CLIP ViT (no checkpoint
    # here); deterministic stand-in = patch-embed matmul + mean pool.
    patches = p_ref[0]                                          # (P, K)
    # Patch embedding on the MXU; CLIP channel norm lives inside w/b.
    # NOTE: on v6e/v7x, casting patches/weights to bf16 (keeping f32 accumulation)
    # gives ~3x MXU throughput and halves the HBM read; kept f32 for the tight check.
    pe = jnp.dot(patches, w_ref[...],
                 preferred_element_type=jnp.float32)            # (P, Dp)
    # Mean-pool over patches + folded normalization bias.
    feat = (jnp.sum(pe, axis=0, keepdims=True) * (1.0 / patches.shape[0])
            + b_ref[...])                                       # (1, Dp)
    # L2 normalization (rsqrt -> EUP slot, no VALU divide).
    inv_norm = lax.rsqrt(jnp.sum(feat * feat, axis=-1, keepdims=True))
    fn = feat * inv_norm                                        # (1, Dp)
    # logits = 100 * cos_sim: the 100x scale and text norm are folded into t_ref,
    # and t_ref is already (D, T) so no transpose is needed.
    logits = jnp.dot(fn, t_ref[...],
                     preferred_element_type=jnp.float32)        # (1, T)
    # Softmax over the text classes; only class 0 is needed.
    m = jnp.max(logits, axis=-1, keepdims=True)
    e = jnp.exp(logits - m)
    prob0 = e[:, 0:1] * pl.reciprocal(jnp.sum(e, axis=-1, keepdims=True),
                                      approx=False)             # (1, 1)
    # Lane-dense store of the per-image scalar.
    o_ref[...] = jnp.broadcast_to(prob0.reshape(1, 1, 1), o_ref.shape)


# ----------------------------- wrappers -----------------------------

def _fold_params(w_patch, text_features):
    """Fold CLIP channel normalization into the patch-embed weights; prep text."""
    d_pad = pl.cdiv(EMBED_DIM, LANE) * LANE
    mean_rows = jnp.repeat(CLIP_MEAN, PATCH * PATCH)            # (K,), c slowest
    std_rows = jnp.repeat(CLIP_STD, PATCH * PATCH)              # (K,)
    w_eff = w_patch / std_rows[:, None]                         # (K, D)
    bias = -(mean_rows / std_rows) @ w_patch                    # (D,)
    w_eff = jnp.pad(w_eff, ((0, 0), (0, d_pad - EMBED_DIM)))    # (K, Dp) lane-dense
    bias_row = jnp.pad(bias, (0, d_pad - EMBED_DIM)).reshape(1, d_pad)
    tn = text_features / jnp.linalg.norm(text_features, axis=-1, keepdims=True)
    txt = jnp.pad((100.0 * tn).T, ((0, d_pad - EMBED_DIM), (0, 0)))  # (Dp, T)
    return w_eff, bias_row, txt


def clip_score_fused(patches, w_eff, bias_row, txt):
    """patches: (B, P, K) raw resized patches -> (B,) class-0 probabilities."""
    B, P, K = patches.shape
    _, Dp = w_eff.shape
    _, T = txt.shape
    out = pl.pallas_call(
        _clip_fused_kernel,
        out_shape=jax.ShapeDtypeStruct((B, 1, Dp), jnp.float32),
        grid_spec=pltpu.PrefetchScalarGridSpec(
            num_scalar_prefetch=0,
            grid=(B,),
            in_specs=[
                pl.BlockSpec((1, P, K), lambda i: (i, 0, 0)),   # per-image patches (double-buffered)
                pl.BlockSpec((K, Dp), lambda i: (0, 0)),        # weights (VMEM-resident)
                pl.BlockSpec((1, Dp), lambda i: (0, 0)),        # folded bias
                pl.BlockSpec((Dp, T), lambda i: (0, 0)),        # text, (D, T)
            ],
            out_specs=pl.BlockSpec((1, 1, Dp), lambda i: (i, 0, 0)),
        ),
        compiler_params=pltpu.CompilerParams(
            dimension_semantics=("parallel",),                  # v7x: shard images over 2 TCs
            vmem_limit_bytes=32 * 1024 * 1024,                  # ~5 MiB used; explicit, safe on 64 MiB v7x
        ),
    )(patches, w_eff, bias_row, txt)
    return out[:, 0, 0]                                         # (B,)


def l_clip_from_feature(x, text_features, w_patch):
    """x: (B, 3, H, W) float32 in [0,1]; text_features: (T, EMBED_DIM)."""
    B = x.shape[0]
    n = RESIZE // PATCH
    # 1) bilinear resize to 224x224 (half-pixel centers == torchvision Resize)
    # TODO(synk): bilinear resize is a gather; kept in plain JAX (jax.image.resize).
    x224 = jax.image.resize(x, (B, 3, RESIZE, RESIZE), method="bilinear")
    # 2) patchify NCHW -> (B, 49, 3072) rows in (c, ph, pw) order.
    # TODO(synk): this is one XLA HBM transpose pass; an in-kernel strided 32x32
    # gather of the NCHW layout does not lower cleanly in Mosaic, so it stays in XLA.
    patches = (x224.reshape(B, 3, n, PATCH, n, PATCH)
               .transpose(0, 2, 4, 1, 3, 5)
               .reshape(B, n * n, K_DIM))
    # 3) one-time tiny parameter prep (fold normalization, pad D, prep text).
    w_eff, bias_row, txt = _fold_params(w_patch, text_features)
    # 4) fused Pallas kernel: patch-embed + mean-pool + L2-norm + logits + softmax + P[class 0].
    probs0 = clip_score_fused(patches, w_eff, bias_row, txt)    # (B,)
    # 5) score = mean over batch of P(text class 0 | image_i).
    return jnp.mean(probs0)


# ----------------------------- reference (silent check) -----------------

def _reference(x, text_features, w_patch):
    x224 = jax.image.resize(x, (x.shape[0], 3, RESIZE, RESIZE), method="bilinear")
    xn = (x224 - CLIP_MEAN[None, :, None, None]) / CLIP_STD[None, :, None, None]
    B = xn.shape[0]
    n = RESIZE // PATCH
    p = xn.reshape(B, 3, n, PATCH, n, PATCH).transpose(0, 2, 4, 1, 3, 5)
    p = p.reshape(B * n * n, K_DIM)
    feat = (p @ w_patch).reshape(B, n * n, EMBED_DIM).mean(axis=1)
    fn = feat / jnp.linalg.norm(feat, axis=-1, keepdims=True)
    tn = text_features / jnp.linalg.norm(text_features, axis=-1, keepdims=True)
    probs = jax.nn.softmax(100.0 * fn @ tn.T, axis=-1)
    return jnp.mean(probs[:, 0])


if __name__ == "__main__":
    key = jax.random.PRNGKey(0)
    k1, k2, k3 = jax.random.split(key, 3)

    B, H, W = 2, 16, 16
    T = 8
    x = jax.random.uniform(k1, (B, 3, H, W), dtype=jnp.float32)
    text_features = jax.random.normal(k2, (T, EMBED_DIM), dtype=jnp.float32)
    w_patch = (jax.random.normal(k3, (3 * PATCH * PATCH, EMBED_DIM),
                                 dtype=jnp.float32) * 0.02)

    score = jax.jit(l_clip_from_feature)(x, text_features, w_patch)
    score = jax.block_until_ready(score)

    ref = _reference(x, text_features, w_patch)
    # Tolerance is slightly looser than before: folding the channel normalization
    # into the weights and padding D reorder the f32 summations, and the x100
    # scale before softmax amplifies those ulp-level differences.
    assert jnp.allclose(score, ref, rtol=1e-3, atol=1e-4), (score, ref)

    print("KERNEL_OK")
</pallas_src>

<mosaic_0001>
module attributes {stable_mosaic.version = 11 : i64} {
  func.func @_clip_fused_kernel(%arg0: i32, %arg1: memref<1x49x3072xf32, #tpu.memory_space<vmem>>, %arg2: memref<3072x128xf32, #tpu.memory_space<vmem>>, %arg3: memref<1x128xf32, #tpu.memory_space<vmem>>, %arg4: memref<128x8xf32, #tpu.memory_space<vmem>>, %arg5: memref<1x1x128xf32, #tpu.memory_space<vmem>>) attributes {dimension_semantics = [#tpu.dimension_semantics<parallel>], iteration_bounds = array<i64: 2>, scalar_prefetch = 0 : i64, scratch_operands = 0 : i64, tpu.core_type = #tpu.core_type<tc>, window_params = [{transform_indices = @transform_0, window_bounds = array<i64: 1, 49, 3072>}, {pipeline_mode = #tpu.pipeline_mode<synchronous>, transform_indices = @transform_1, window_bounds = array<i64: 3072, 128>}, {pipeline_mode = #tpu.pipeline_mode<synchronous>, transform_indices = @transform_2, window_bounds = array<i64: 1, 128>}, {pipeline_mode = #tpu.pipeline_mode<synchronous>, transform_indices = @transform_3, window_bounds = array<i64: 128, 8>}, {transform_indices = @transform_4, window_bounds = array<i64: 1, 1, 128>}]} {
    %c0 = arith.constant 0 : index
    %c0_0 = arith.constant 0 : index
    %c0_1 = arith.constant 0 : index
    %0 = vector.load %arg1[%c0, %c0_0, %c0_1] : memref<1x49x3072xf32, #tpu.memory_space<vmem>>, vector<1x49x3072xf32>
    %1 = vector.shape_cast %0 : vector<1x49x3072xf32> to vector<49x3072xf32>
    %c0_2 = arith.constant 0 : index
    %c0_3 = arith.constant 0 : index
    %2 = vector.load %arg2[%c0_2, %c0_3] : memref<3072x128xf32, #tpu.memory_space<vmem>>, vector<3072x128xf32>
    %cst = arith.constant dense<0.000000e+00> : vector<49x128xf32>
    %3 = tpu.matmul %1, %2, %cst {dimension_numbers = #tpu.dot_dimension_numbers<[1], [0], [0], [1], [0, 0, 1, 1], [], []>} : vector<49x3072xf32>, vector<3072x128xf32>, vector<49x128xf32> -> vector<49x128xf32>
    %cst_4 = arith.constant dense<0.000000e+00> : vector<128xf32>
    %4 = vector.multi_reduction <add>, %3, %cst_4 [0] : vector<49x128xf32> to vector<128xf32>
    %5 = vector.shape_cast %4 : vector<128xf32> to vector<1x128xf32>
    %cst_5 = arith.constant 0.0204081628 : f32
    %6 = vector.broadcast %cst_5 : f32 to vector<1x128xf32>
    %7 = arith.mulf %5, %6 : vector<1x128xf32>
    %c0_6 = arith.constant 0 : index
    %c0_7 = arith.constant 0 : index
    %8 = vector.load %arg3[%c0_6, %c0_7] : memref<1x128xf32, #tpu.memory_space<vmem>>, vector<1x128xf32>
    %9 = arith.addf %7, %8 : vector<1x128xf32>
    %10 = arith.mulf %9, %9 : vector<1x128xf32>
    %cst_8 = arith.constant dense<0.000000e+00> : vector<1xf32>
    %11 = vector.multi_reduction <add>, %10, %cst_8 [1] : vector<1x128xf32> to vector<1xf32>
    %12 = vector.shape_cast %11 : vector<1xf32> to vector<1x1xf32>
    %13 = math.rsqrt %12 : vector<1x1xf32>
    %14 = vector.broadcast %13 : vector<1x1xf32> to vector<1x128xf32>
    %15 = arith.mulf %9, %14 : vector<1x128xf32>
    %c0_9 = arith.constant 0 : index
    %c0_10 = arith.constant 0 : index
    %16 = vector.load %arg4[%c0_9, %c0_10] : memref<128x8xf32, #tpu.memory_space<vmem>>, vector<128x8xf32>
    %cst_11 = arith.constant dense<0.000000e+00> : vector<1x8xf32>
    %17 = tpu.matmul %15, %16, %cst_11 {dimension_numbers = #tpu.dot_dimension_numbers<[1], [0], [0], [1], [0, 0, 1, 1], [], []>} : vector<1x128xf32>, vector<128x8xf32>, vector<1x8xf32> -> vector<1x8xf32>
    %cst_12 = arith.constant dense<0xFF800000> : vector<1xf32>
    %18 = vector.multi_reduction <maximumf>, %17, %cst_12 [1] : vector<1x8xf32> to vector<1xf32>
    %19 = vector.shape_cast %18 : vector<1xf32> to vector<1x1xf32>
    %20 = vector.broadcast %19 : vector<1x1xf32> to vector<1x8xf32>
    %21 = arith.subf %17, %20 : vector<1x8xf32>
    %22 = math.exp %21 : vector<1x8xf32>
    %23 = vector.extract_strided_slice %22 {offsets = [0, 0], sizes = [1, 1], strides = [1, 1]} : vector<1x8xf32> to vector<1x1xf32>
    %cst_13 = arith.constant dense<0.000000e+00> : vector<1xf32>
    %24 = vector.multi_reduction <add>, %22, %cst_13 [1] : vector<1x8xf32> to vector<1xf32>
    %25 = vector.shape_cast %24 : vector<1xf32> to vector<1x1xf32>
    %26 = tpu.reciprocal %25 : vector<1x1xf32> -> vector<1x1xf32>
    %27 = arith.mulf %23, %26 : vector<1x1xf32>
    %28 = vector.shape_cast %27 : vector<1x1xf32> to vector<1x1x1xf32>
    %29 = vector.shape_cast %28 : vector<1x1x1xf32> to vector<1x1x1xf32>
    %30 = vector.broadcast %29 : vector<1x1x1xf32> to vector<1x1x128xf32>
    %c0_14 = arith.constant 0 : index
    %c0_15 = arith.constant 0 : index
    %c0_16 = arith.constant 0 : index
    %31 = vector.load %arg5[%c0_14, %c0_15, %c0_16] : memref<1x1x128xf32, #tpu.memory_space<vmem>>, vector<1x1x128xf32>
    tpu.vector_store %arg5[%c0_14, %c0_15, %c0_16], %30 {strides = array<i32>} : memref<1x1x128xf32, #tpu.memory_space<vmem>>, vector<1x1x128xf32>,
    return
  }
  func.func @transform_0(%arg0: i32) -> (i32, i32, i32) {
    %c0_i32 = arith.constant 0 : i32
    %c0_i32_0 = arith.constant 0 : i32
    %c0_i32_1 = arith.constant 0 : i32
    return %arg0, %c0_i32, %c0_i32_0 : i32, i32, i32
  }
  func.func @transform_1(%arg0: i32) -> (i32, i32) {
    %c0_i32 = arith.constant 0 : i32
    %c0_i32_0 = arith.constant 0 : i32
    %c0_i32_1 = arith.constant 0 : i32
    return %c0_i32, %c0_i32_0 : i32, i32
  }
  func.func @transform_2(%arg0: i32) -> (i32, i32) {
    %c0_i32 = arith.constant 0 : i32
    %c0_i32_0 = arith.constant 0 : i32
    %c0_i32_1 = arith.constant 0 : i32
    return %c0_i32, %c0_i32_0 : i32, i32
  }
  func.func @transform_3(%arg0: i32) -> (i32, i32) {
    %c0_i32 = arith.constant 0 : i32
    %c0_i32_0 = arith.constant 0 : i32
    %c0_i32_1 = arith.constant 0 : i32
    return %c0_i32, %c0_i32_0 : i32, i32
  }
  func.func @transform_4(%arg0: i32) -> (i32, i32, i32) {
    %c0_i32 = arith.constant 0 : i32
    %c0_i32_0 = arith.constant 0 : i32
    %c0_i32_1 = arith.constant 0 : i32
    return %arg0, %c0_i32, %c0_i32_0 : i32, i32, i32
  }
}

</mosaic_0001>

<llo_original>
// kernel: div.31
$region0: #{div.31}
  %s0 = inlined_call_operand.vmem [shape: f32[3,1024], index: 0, kind: input, shape index: {}]
  %s1 = inlined_call_operand.vmem [shape: f32[3072], index: 1, kind: output, shape index: {}]
  $region1: #{div.31} parent=0
    #allocation0 [shape = 'u8[32768]{0}', space=vmem, size = 0x8000, scoped, tag = 'scoped mem for input reshape']
    %s3 = sshll.u32 1, 4
    %s4 = ssub.s32 %s3, 1
    %s5 = smul.addr 4, 7
    %s6 = scalar_lea.vmem %s0, %s5
    %v7 = vld [vmem:[%s6] sm:%s4]
    %s8 = scalar_lea.vmem [#allocation0], 56
    %9 = vst [vmem:[%s8] sm:%s4] %v7
    %s10 = smul.addr 4, 6
    %s11 = scalar_lea.vmem %s0, %s10
    %v12 = vld [vmem:[%s11] sm:%s4]
    %s13 = scalar_lea.vmem [#allocation0], 48
    %14 = vst [vmem:[%s13] sm:%s4] %v12
    %s15 = smul.addr 4, 5
    %s16 = scalar_lea.vmem %s0, %s15
    %v17 = vld [vmem:[%s16] sm:%s4]
    %s18 = scalar_lea.vmem [#allocation0], 40
    %19 = vst [vmem:[%s18] sm:%s4] %v17
    %s20 = smul.addr 4, 4
    %s21 = scalar_lea.vmem %s0, %s20
    %v22 = vld [vmem:[%s21] sm:%s4]
    %s23 = scalar_lea.vmem [#allocation0], 32
    %24 = vst [vmem:[%s23] sm:%s4] %v22
    %s25 = smul.addr 4, 3
    %s26 = scalar_lea.vmem %s0, %s25
    %v27 = vld [vmem:[%s26] sm:%s4]
    %s28 = scalar_lea.vmem [#allocation0], 24
    %29 = vst [vmem:[%s28] sm:%s4] %v27
    %s30 = smul.addr 4, 2
    %s31 = scalar_lea.vmem %s0, %s30
    %v32 = vld [vmem:[%s31] sm:%s4]
    %s33 = scalar_lea.vmem [#allocation0], 16
    %34 = vst [vmem:[%s33] sm:%s4] %v32
    %s35 = scalar_lea.vmem %s0, 4
    %v36 = vld [vmem:[%s35] sm:%s4]
    %s37 = scalar_lea.vmem [#allocation0], 8
    %38 = vst [vmem:[%s37] sm:%s4] %v36
    %v39 = vld [vmem:[%s0] sm:%s4]
    %40 = vst [vmem:[#allocation0] sm:%s4] %v39
    %v41 = vld [vmem:[#allocation0] sm:$0x7]
    %42 = vst [vmem:[%s1] ss:$8 sm:$0x7] %v41
    %s43 = scalar_lea.vmem [#allocation0], 8
    %v44 = vld [vmem:[%s43] sm:$0x7]
    %s45 = scalar_lea.vmem %s1, 1
    %46 = vst [vmem:[%s45] ss:$8 sm:$0x7] %v44
    %s47 = scalar_lea.vmem [#allocation0], 16
    %v48 = vld [vmem:[%s47] sm:$0x7]
    %s49 = scalar_lea.vmem %s1, 2
    %50 = vst [vmem:[%s49] ss:$8 sm:$0x7] %v48
    %s51 = scalar_lea.vmem [#allocation0], 24
    %v52 = vld [vmem:[%s51] sm:$0x7]
    %s53 = scalar_lea.vmem %s1, 3
    %54 = vst [vmem:[%s53] ss:$8 sm:$0x7] %v52
    %s55 = scalar_lea.vmem [#allocation0], 32
    %v56 = vld [vmem:[%s55] sm:$0x7]
    %s57 = scalar_lea.vmem %s1, 4
    %58 = vst [vmem:[%s57] ss:$8 sm:$0x7] %v56
    %s59 = scalar_lea.vmem [#allocation0], 40
    %v60 = vld [vmem:[%s59] sm:$0x7]
    %s61 = scalar_lea.vmem %s1, 5
    %62 = vst [vmem:[%s61] ss:$8 sm:$0x7] %v60
    %s63 = scalar_lea.vmem [#allocation0], 48
    %v64 = vld [vmem:[%s63] sm:$0x7]
    %s65 = scalar_lea.vmem %s1, 6
    %66 = vst [vmem:[%s65] ss:$8 sm:$0x7] %v64
    %s67 = scalar_lea.vmem [#allocation0], 56
    %v68 = vld [vmem:[%s67] sm:$0x7]
    %s69 = scalar_lea.vmem %s1, 7
    %70 = vst [vmem:[%s69] ss:$8 sm:$0x7] %v68

// kernel: l_clip_from_feature.1
$region0: #{l_clip_from_feature.1}
  #allocation0 [shape = 'u32[]', space=smem, size = 0x4, offset = 0x4, fixed_abs, tag = 'smem constant byte address 0x4 - core index']
  #allocation1 [shape = 'u32[144,128]{1,0:T(1,128)}', space=vmem, size = 0x12000, scoped, tag = 'internal scratch']
  %s0 = inlined_call_operand.vmem [shape: f32[2,49,3072], index: 0, kind: input, shape index: {}]
  %s1 = inlined_call_operand.vmem [shape: f32[3072,128], index: 1, kind: input, shape index: {}]
  %s2 = inlined_call_operand.vmem [shape: f32[1,128], index: 2, kind: input, shape index: {}]
  %s3 = inlined_call_operand.vmem [shape: f32[128,8], index: 3, kind: input, shape index: {}]
  %s4 = inlined_call_operand.vmem [shape: f32[2,1,128], index: 4, kind: output, shape index: {}]
  %s5 = sld [smem:[#allocation0]]
  $region49: #{l_clip_from_feature.1} parent=0
    _
  %s7 = ssub.s32 1, %s5
  %s8 = scalar_select 0, %s7, %s5
  loop: start=0, step=1, limit=4
  $region2: #{l_clip_from_feature.1} parent=0 // loop_pre_header
    _
  $region3: #{l_clip_from_feature.1} parent=0 // loop_header
    %s10 = sphi 0, %s14
    %p11 = scmp.ge.s32.totalorder %s10, 4
    %s20 = sphi 0, %s22
    %s23 = sphi 0, %s20
    %s24 = sphi 0, %s23
    %s40 = sphi 0, %s24
    %s44 = sphi 0, %s44
    %s46 = sphi 0, %s44
    %s47 = sphi 0, %s46
    %s61 = sphi 0, %s47
    %s65 = sphi 0, %s65
    %s67 = sphi 0, %s65
    %s68 = sphi 0, %s67
    %s82 = sphi 0, %s68
    %s86 = sphi 0, %s86
    %s88 = sphi 0, %s86
    %s89 = sphi 0, %s88
    %s103 = sphi 0, %s89
    %s109 = sphi 0, %s111
    %s112 = sphi 0, %s109
    %s113 = sphi 0, %s112
    %s129 = sphi 0, %s113
  $region4: #{l_clip_from_feature.1} parent=0 // loop_header_branch
    %13 = sbr.rel (%p11) target = $region8
  $region5: #{l_clip_from_feature.1} parent=0 // loop_body
    %s15 = ssub.s32 %s10, 1
    %s16 = ssub.s32 %s10, 2
    %s17 = sadd.s32 %s10, 1
    %s18 = ssub.s32 %s10, %s17
    %p19 = scmp.eq.s32.totalorder %s18, 0
    %s21 = sadd.s32 %s20, 1
    %s22 = scalar_select %p19, %s20, %s21
    %p25 = pneg %p19
    %p26 = scmp.eq.s32.totalorder %s10, 1
    %p27 = por %p25, %p26
    %p28 = scmp.ne.s32.totalorder %s20, %s23
    %p29 = scmp.eq.s32.totalorder %s10, 0
    %p30 = por %p28, %p29
    %p31 = scmp.ne.s32.totalorder %s20, %s23
    %p32 = scmp.eq.s32.totalorder %s15, 1
    %p33 = por %p31, %p32
    %p34 = scmp.ne.s32.totalorder %s23, %s24
    %p35 = scmp.eq.s32.totalorder %s15, 0
    %p36 = por %p34, %p35
    %p37 = scmp.ne.s32.totalorder %s23, %s24
    %p38 = scmp.eq.s32.totalorder %s16, 1
    %p39 = por %p37, %p38
    %p41 = scmp.ne.s32.totalorder %s24, %s40
    %p42 = scmp.eq.s32.totalorder %s16, 0
    %p43 = por %p41, %p42
    %s45 = sadd.s32 %s44, 1
    %p48 = scmp.eq.s32.totalorder %s10, 1
    %p49 = scmp.ne.s32.totalorder %s44, %s46
    %p50 = scmp.eq.s32.totalorder %s10, 0
    %p51 = por %p49, %p50
    %p52 = scmp.ne.s32.totalorder %s44, %s46
    %p53 = scmp.eq.s32.totalorder %s15, 1
    %p54 = por %p52, %p53
    %p55 = scmp.ne.s32.totalorder %s46, %s47
    %p56 = scmp.eq.s32.totalorder %s15, 0
    %p57 = por %p55, %p56
    %p58 = scmp.ne.s32.totalorder %s46, %s47
    %p59 = scmp.eq.s32.totalorder %s16, 1
    %p60 = por %p58, %p59
    %p62 = scmp.ne.s32.totalorder %s47, %s61
    %p63 = scmp.eq.s32.totalorder %s16, 0
    %p64 = por %p62, %p63
    %s66 = sadd.s32 %s65, 1
    %p69 = scmp.eq.s32.totalorder %s10, 1
    %p70 = scmp.ne.s32.totalorder %s65, %s67
    %p71 = scmp.eq.s32.totalorder %s10, 0
    %p72 = por %p70, %p71
    %p73 = scmp.ne.s32.totalorder %s65, %s67
    %p74 = scmp.eq.s32.totalorder %s15, 1
    %p75 = por %p73, %p74
    %p76 = scmp.ne.s32.totalorder %s67, %s68
    %p77 = scmp.eq.s32.totalorder %s15, 0
    %p78 = por %p76, %p77
    %p79 = scmp.ne.s32.totalorder %s67, %s68
    %p80 = scmp.eq.s32.totalorder %s16, 1
    %p81 = por %p79, %p80
    %p83 = scmp.ne.s32.totalorder %s68, %s82
    %p84 = scmp.eq.s32.totalorder %s16, 0
    %p85 = por %p83, %p84
    %s87 = sadd.s32 %s86, 1
    %p90 = scmp.eq.s32.totalorder %s10, 1
    %p91 = scmp.ne.s32.totalorder %s86, %s88
    %p92 = scmp.eq.s32.totalorder %s10, 0
    %p93 = por %p91, %p92
    %p94 = scmp.ne.s32.totalorder %s86, %s88
    %p95 = scmp.eq.s32.totalorder %s15, 1
    %p96 = por %p94, %p95
    %p97 = scmp.ne.s32.totalorder %s88, %s89
    %p98 = scmp.eq.s32.totalorder %s15, 0
    %p99 = por %p97, %p98
    %p100 = scmp.ne.s32.totalorder %s88, %s89
    %p101 = scmp.eq.s32.totalorder %s16, 1
    %p102 = por %p100, %p101
    %p104 = scmp.ne.s32.totalorder %s89, %s103
    %p105 = scmp.eq.s32.totalorder %s16, 0
    %p106 = por %p104, %p105
    %s107 = ssub.s32 %s10, %s17
    %p108 = scmp.eq.s32.totalorder %s107, 0
    %s110 = sadd.s32 %s109, 1
    %s111 = scalar_select %p108, %s109, %s110
    %p114 = pneg %p108
    %p115 = scmp.eq.s32.totalorder %s10, 1
    %p116 = por %p114, %p115
    %p117 = scmp.ne.s32.totalorder %s109, %s112
    %p118 = scmp.eq.s32.totalorder %s10, 0
    %p119 = por %p117, %p118
    %p120 = scmp.ne.s32.totalorder %s109, %s112
    %p121 = scmp.eq.s32.totalorder %s15, 1
    %p122 = por %p120, %p121
    %p123 = scmp.ne.s32.totalorder %s112, %s113
    %p124 = scmp.eq.s32.totalorder %s15, 0
    %p125 = por %p123, %p124
    %p126 = scmp.ne.s32.totalorder %s112, %s113
    %p127 = scmp.eq.s32.totalorder %s16, 1
    %p128 = por %p126, %p127
    %p130 = scmp.ne.s32.totalorder %s113, %s129
    %p131 = scmp.eq.s32.totalorder %s16, 0
    %p132 = por %p130, %p131
    %p133 = scmp.le.s32.totalorder 1, %s10
    %p134 = scmp.lt.s32.totalorder %s10, 3
    %p135 = pnand %p133, %p134
    %p136 = pneg %p135
    // Predicated region
    $region9: #{l_clip_from_feature.1} parent=5 // pred_check
      _
    $region10: #{l_clip_from_feature.1} parent=5 // pred_check_branch
      %138 = sbr.rel (%p135) target = $region12
    $region11: #{l_clip_from_feature.1} parent=5 // pred_region
      %s139 = ssub.s32 %s10, 1
      // Predicated region
      $region13: #{l_clip_from_feature.1} parent=11 // pred_check
        %p140 = pneg %p57
      $region14: #{l_clip_from_feature.1} parent=11 // pred_check_branch
        %142 = sbr.rel (%p140) target = $region16
      $region15: #{l_clip_from_feature.1} parent=11 // pred_region
        _
      $region16: #{l_clip_from_feature.1} parent=11 // pred_fallthru
        _
      // Predicated region
      $region17: #{l_clip_from_feature.1} parent=11 // pred_check
        %p143 = pneg %p78
      $region18: #{l_clip_from_feature.1} parent=11 // pred_check_branch
        %145 = sbr.rel (%p143) target = $region20
      $region19: #{l_clip_from_feature.1} parent=11 // pred_region
        _
      $region20: #{l_clip_from_feature.1} parent=11 // pred_fallthru
        _
      // Predicated region
      $region21: #{l_clip_from_feature.1} parent=11 // pred_check
        %p146 = pneg %p99
      $region22: #{l_clip_from_feature.1} parent=11 // pred_check_branch
        %148 = sbr.rel (%p146) target = $region24
      $region23: #{l_clip_from_feature.1} parent=11 // pred_region
        _
      $region24: #{l_clip_from_feature.1} parent=11 // pred_fallthru
        _
    $region12: #{l_clip_from_feature.1} parent=5 // pred_fallthru
      _
    %p149 = scmp.lt.s32.totalorder %s10, 2
    // Predicated region
    $region25: #{l_clip_from_feature.1} parent=5 // pred_check
      %p150 = pneg %p149
    $region26: #{l_clip_from_feature.1} parent=5 // pred_check_branch
      %152 = sbr.rel (%p150) target = $region28
    $region27: #{l_clip_from_feature.1} parent=5 // pred_region
      // Predicated region
      $region29: #{l_clip_from_feature.1} parent=27 // pred_check
        %p153 = pneg %p30
      $region30: #{l_clip_from_feature.1} parent=27 // pred_check_branch
        %155 = sbr.rel (%p153) target = $region32
      $region31: #{l_clip_from_feature.1} parent=27 // pred_region
        %p156 = scmp.lt.s32.totalorder %s10, 1
        %s157 = scalar_select %p156, %s10, 1
        %s158 = smul.addr %s157, 168
        %s159 = smul.addr %s158, 8
        %s160 = scalar_lea.vmem %s0, %s159
      $region32: #{l_clip_from_feature.1} parent=27 // pred_fallthru
        _
    $region28: #{l_clip_from_feature.1} parent=5 // pred_fallthru
      _
    %p161 = scmp.le.s32.totalorder 1, %s10
    %p162 = scmp.lt.s32.totalorder %s10, 3
    %p163 = pnand %p161, %p162
    %p164 = pneg %p163
    // Predicated region
    $region33: #{l_clip_from_feature.1} parent=5 // pred_check
      _
    $region34: #{l_clip_from_feature.1} parent=5 // pred_check_branch
      %166 = sbr.rel (%p163) target = $region36
    $region35: #{l_clip_from_feature.1} parent=5 // pred_region
      %s167 = ssub.s32 %s10, 1
      %p168 = scmp.lt.s32.totalorder %s15, 1
      %s169 = scalar_select %p168, %s15, 1
      %s170 = smul.addr %s169, 168
      %s171 = smul.addr %s170, 8
      %s172 = scalar_lea.vmem %s0, %s171
      %p173 = pneg %p36
      %p174 = pneg %p33
      %p175 = pneg %p57
      %p176 = pneg %p54
      %p177 = pneg %p78
      %p178 = pneg %p75
      %p179 = pneg %p99
      %p180 = pneg %p96
      %p181 = pneg %p125
      %p182 = pneg %p122
      %p183 = scmp.lt.s32.totalorder %s15, 1
      %s184 = scalar_select %p183, %s15, 1
      %s185 = scalar_lea.vmem %s4, %s184
      %p186 = scmp.lt.s32.totalorder %s15, 1
      %s187 = scalar_select %p186, %s15, 1
      %s188 = smul.addr %s187, 168
      %s189 = smul.addr %s188, 8
      %s190 = scalar_lea.vmem %s0, %s189
      %p191 = scmp.lt.s32.totalorder %s15, 1
      %s192 = scalar_select %p191, %s15, 1
      %s193 = scalar_lea.vmem %s4, %s192
      %v194 = vld [vmem:[%s190] sm:$0xff]
      %v195 = vld [vmem:[%s190 + $0x8] sm:$0xff]
      %v196 = vld [vmem:[%s190 + $0x10] sm:$0xff]
      %v197 = vld [vmem:[%s190 + $0x18] sm:$0xff]
      %v198 = vld [vmem:[%s190 + $0x20] sm:$0xff]
      %v199 = vld [vmem:[%s190 + $0x28] sm:$0xff]
      %v200 = vld [vmem:[%s190 + $0x30] sm:$0xff]
      %v201 = vld [vmem:[%s190 + $0x38] sm:$0xff]
      %v202 = vld [vmem:[%s190 + $0x40] sm:$0xff]
      %v203 = vld [vmem:[%s190 + $0x48] sm:$0xff]
      %v204 = vld [vmem:[%s190 + $0x50] sm:$0xff]
      %v205 = vld [vmem:[%s190 + $0x58] sm:$0xff]
      %v206 = vld [vmem:[%s190 + $0x60] sm:$0xff]
      %v207 = vld [vmem:[%s190 + $0x68] sm:$0xff]
      %v208 = vld [vmem:[%s190 + $0x70] sm:$0xff]
      %v209 = vld [vmem:[%s190 + $0x78] sm:$0xff]
      %v210 = vld [vmem:[%s190 + $0x80] sm:$0xff]
      %v211 = vld [vmem:[%s190 + $0x88] sm:$0xff]
      %v212 = vld [vmem:[%s190 + $0x90] sm:$0xff]
      %v213 = vld [vmem:[%s190 + $0x98] sm:$0xff]
      %v214 = vld [vmem:[%s190 + $0xa0] sm:$0xff]
      %v215 = vld [vmem:[%s190 + $0xa8] sm:$0xff]
      %v216 = vld [vmem:[%s190 + $0xb0] sm:$0xff]
      %v217 = vld [vmem:[%s190 + $0xb8] sm:$0xff]
      %v218 = vld [vmem:[%s190 + $0xc0] sm:$0xff]
      %v219 = vld [vmem:[%s190 + $0xc8] sm:$0xff]
      %v220 = vld [vmem:[%s190 + $0xd0] sm:$0xff]
      %v221 = vld [vmem:[%s190 + $0xd8] sm:$0xff]
      %v222 = vld [vmem:[%s190 + $0xe0] sm:$0xff]
      %v223 = vld [vmem:[%s190 + $0xe8] sm:$0xff]
      %v224 = vld [vmem:[%s190 + $0xf0] sm:$0xff]
      %v225 = vld [vmem:[%s190 + $0xf8] sm:$0xff]
      %v226 = vld [vmem:[%s190 + $0x100] sm:$0xff]
      %v227 = vld [vmem:[%s190 + $0x108] sm:$0xff]
      %v228 = vld [vmem:[%s190 + $0x110] sm:$0xff]
      %v229 = vld [vmem:[%s190 + $0x118] sm:$0xff]
      %v230 = vld [vmem:[%s190 + $0x120] sm:$0xff]
      %v231 = vld [vmem:[%s190 + $0x128] sm:$0xff]
      %v232 = vld [vmem:[%s190 + $0x130] sm:$0xff]
      %v233 = vld [vmem:[%s190 + $0x138] sm:$0xff]
      %v234 = vld [vmem:[%s190 + $0x140] sm:$0xff]
      %v235 = vld [vmem:[%s190 + $0x148] sm:$0xff]
      %v236 = vld [vmem:[%s190 + $0x150] sm:$0xff]
      %v237 = vld [vmem:[%s190 + $0x158] sm:$0xff]
      %v238 = vld [vmem:[%s190 + $0x160] sm:$0xff]
      %v239 = vld [vmem:[%s190 + $0x168] sm:$0xff]
      %v240 = vld [vmem:[%s190 + $0x170] sm:$0xff]
      %v241 = vld [vmem:[%s190 + $0x178] sm:$0xff]
      %v242 = vld [vmem:[%s190 + $0x180] sm:$0xff]
      %v243 = vld [vmem:[%s190 + $0x188] sm:$0xff]
      %v244 = vld [vmem:[%s190 + $0x190] sm:$0xff]
      %v245 = vld [vmem:[%s190 + $0x198] sm:$0xff]
      %v246 = vld [vmem:[%s190 + $0x1a0] sm:$0xff]
      %v247 = vld [vmem:[%s190 + $0x1a8] sm:$0xff]
      %v248 = vld [vmem:[%s190 + $0x1b0] sm:$0xff]
      %v249 = vld [vmem:[%s190 + $0x1b8] sm:$0xff]
      %v250 = vld [vmem:[%s190 + $0x1c0] sm:$0xff]
      %v251 = vld [vmem:[%s190 + $0x1c8] sm:$0xff]
      %v252 = vld [vmem:[%s190 + $0x1d0] sm:$0xff]
      %v253 = vld [vmem:[%s190 + $0x1d8] sm:$0xff]
      %v254 = vld [vmem:[%s190 + $0x1e0] sm:$0xff]
      %v255 = vld [vmem:[%s190 + $0x1e8] sm:$0xff]
      %v256 = vld [vmem:[%s190 + $0x1f0] sm:$0xff]
      %v257 = vld [vmem:[%s190 + $0x1f8] sm:$0xff]
      %v258 = vld [vmem:[%s190 + $0x200] sm:$0xff]
      %v259 = vld [vmem:[%s190 + $0x208] sm:$0xff]
      %v260 = vld [vmem:[%s190 + $0x210] sm:$0xff]
      %v261 = vld [vmem:[%s190 + $0x218] sm:$0xff]
      %v262 = vld [vmem:[%s190 + $0x220] sm:$0xff]
      %v263 = vld [vmem:[%s190 + $0x228] sm:$0xff]
      %v264 = vld [vmem:[%s190 + $0x230] sm:$0xff]
      %v265 = vld [vmem:[%s190 + $0x238] sm:$0xff]
      %v266 = vld [vmem:[%s190 + $0x240] sm:$0xff]
      %v267 = vld [vmem:[%s190 + $0x248] sm:$0xff]
      %v268 = vld [vmem:[%s190 + $0x250] sm:$0xff]
      %v269 = vld [vmem:[%s190 + $0x258] sm:$0xff]
      %v270 = vld [vmem:[%s190 + $0x260] sm:$0xff]
      %v271 = vld [vmem:[%s190 + $0x268] sm:$0xff]
      %v272 = vld [vmem:[%s190 + $0x270] sm:$0xff]
      %v273 = vld [vmem:[%s190 + $0x278] sm:$0xff]
      %v274 = vld [vmem:[%s190 + $0x280] sm:$0xff]
      %v275 = vld [vmem:[%s190 + $0x288] sm:$0xff]
      %v276 = vld [vmem:[%s190 + $0x290] sm:$0xff]
      %v277 = vld [vmem:[%s190 + $0x298] sm:$0xff]
      %v278 = vld [vmem:[%s190 + $0x2a0] sm:$0xff]
      %v279 = vld [vmem:[%s190 + $0x2a8] sm:$0xff]
      %v280 = vld [vmem:[%s190 + $0x2b0] sm:$0xff]
      %v281 = vld [vmem:[%s190 + $0x2b8] sm:$0xff]
      %v282 = vld [vmem:[%s190 + $0x2c0] sm:$0xff]
      %v283 = vld [vmem:[%s190 + $0x2c8] sm:$0xff]
      %v284 = vld [vmem:[%s190 + $0x2d0] sm:$0xff]
      %v285 = vld [vmem:[%s190 + $0x2d8] sm:$0xff]
      %v286 = vld [vmem:[%s190 + $0x2e0] sm:$0xff]
      %v287 = vld [vmem:[%s190 + $0x2e8] sm:$0xff]
      %v288 = vld [vmem:[%s190 + $0x2f0] sm:$0xff]
      %v289 = vld [vmem:[%s190 + $0x2f8] sm:$0xff]
      %v290 = vld [vmem:[%s190 + $0x300] sm:$0xff]
      %v291 = vld [vmem:[%s190 + $0x308] sm:$0xff]
      %v292 = vld [vmem:[%s190 + $0x310] sm:$0xff]
      %v293 = vld [vmem:[%s190 + $0x318] sm:$0xff]
      %v294 = vld [vmem:[%s190 + $0x320] sm:$0xff]
      %v295 = vld [vmem:[%s190 + $0x328] sm:$0xff]
      %v296 = vld [vmem:[%s190 + $0x330] sm:$0xff]
      %v297 = vld [vmem:[%s190 + $0x338] sm:$0xff]
      %v298 = vld [vmem:[%s190 + $0x340] sm:$0xff]
      %v299 = vld [vmem:[%s190 + $0x348] sm:$0xff]
      %v300 = vld [vmem:[%s190 + $0x350] sm:$0xff]
      %v301 = vld [vmem:[%s190 + $0x358] sm:$0xff]
      %v302 = vld [vmem:[%s190 + $0x360] sm:$0xff]
      %v303 = vld [vmem:[%s190 + $0x368] sm:$0xff]
      %v304 = vld [vmem:[%s190 + $0x370] sm:$0xff]
      %v305 = vld [vmem:[%s190 + $0x378] sm:$0xff]
      %v306 = vld [vmem:[%s190 + $0x380] sm:$0xff]
      %v307 = vld [vmem:[%s190 + $0x388] sm:$0xff]
      %v308 = vld [vmem:[%s190 + $0x390] sm:$0xff]
      %v309 = vld [vmem:[%s190 + $0x398] sm:$0xff]
      %v310 = vld [vmem:[%s190 + $0x3a0] sm:$0xff]
      %v311 = vld [vmem:[%s190 + $0x3a8] sm:$0xff]
      %v312 = vld [vmem:[%s190 + $0x3b0] sm:$0xff]
      %v313 = vld [vmem:[%s190 + $0x3b8] sm:$0xff]
      %v314 = vld [vmem:[%s190 + $0x3c0] sm:$0xff]
      %v315 = vld [vmem:[%s190 + $0x3c8] sm:$0xff]
      %v316 = vld [vmem:[%s190 + $0x3d0] sm:$0xff]
      %v317 = vld [vmem:[%s190 + $0x3d8] sm:$0xff]
      %v318 = vld [vmem:[%s190 + $0x3e0] sm:$0xff]
      %v319 = vld [vmem:[%s190 + $0x3e8] sm:$0xff]
      %v320 = vld [vmem:[%s190 + $0x3f0] sm:$0xff]
      %v321 = vld [vmem:[%s190 + $0x3f8] sm:$0xff]
      %v322 = vld [vmem:[%s190 + $0x400] sm:$0xff]
      %v323 = vld [vmem:[%s190 + $0x408] sm:$0xff]
      %v324 = vld [vmem:[%s190 + $0x410] sm:$0xff]
      %v325 = vld [vmem:[%s190 + $0x418] sm:$0xff]
      %v326 = vld [vmem:[%s190 + $0x420] sm:$0xff]
      %v327 = vld [vmem:[%s190 + $0x428] sm:$0xff]
      %v328 = vld [vmem:[%s190 + $0x430] sm:$0xff]
      %v329 = vld [vmem:[%s190 + $0x438] sm:$0xff]
      %v330 = vld [vmem:[%s190 + $0x440] sm:$0xff]
      %v331 = vld [vmem:[%s190 + $0x448] sm:$0xff]
      %v332 = vld [vmem:[%s190 + $0x450] sm:$0xff]
      %v333 = vld [vmem:[%s190 + $0x458] sm:$0xff]
      %v334 = vld [vmem:[%s190 + $0x460] sm:$0xff]
      %v335 = vld [vmem:[%s190 + $0x468] sm:$0xff]
      %v336 = vld [vmem:[%s190 + $0x470] sm:$0xff]
      %v337 = vld [vmem:[%s190 + $0x478] sm:$0xff]
      %v338 = vld [vmem:[%s190 + $0x480] sm:$0x1]
      %v339 = vld [vmem:[%s190 + $0x488] sm:$0x1]
      %v340 = vld [vmem:[%s190 + $0x490] sm:$0x1]
      %v341 = vld [vmem:[%s190 + $0x498] sm:$0x1]
      %v342 = vld [vmem:[%s190 + $0x4a0] sm:$0x1]
      %v343 = vld [vmem:[%s190 + $0x4a8] sm:$0x1]
      %v344 = vld [vmem:[%s190 + $0x4b0] sm:$0x1]
      %v345 = vld [vmem:[%s190 + $0x4b8] sm:$0x1]
      %v346 = vld [vmem:[%s190 + $0x4c0] sm:$0x1]
      %v347 = vld [vmem:[%s190 + $0x4c8] sm:$0x1]
      %v348 = vld [vmem:[%s190 + $0x4d0] sm:$0x1]
      %v349 = vld [vmem:[%s190 + $0x4d8] sm:$0x1]
      %v350 = vld [vmem:[%s190 + $0x4e0] sm:$0x1]
      %v351 = vld [vmem:[%s190 + $0x4e8] sm:$0x1]
      %v352 = vld [vmem:[%s190 + $0x4f0] sm:$0x1]
      %v353 = vld [vmem:[%s190 + $0x4f8] sm:$0x1]
      %v354 = vld [vmem:[%s190 + $0x500] sm:$0x1]
      %v355 = vld [vmem:[%s190 + $0x508] sm:$0x1]
      %v356 = vld [vmem:[%s190 + $0x510] sm:$0x1]
      %v357 = vld [vmem:[%s190 + $0x518] sm:$0x1]
      %v358 = vld [vmem:[%s190 + $0x520] sm:$0x1]
      %v359 = vld [vmem:[%s190 + $0x528] sm:$0x1]
      %v360 = vld [vmem:[%s190 + $0x530] sm:$0x1]
      %v361 = vld [vmem:[%s190 + $0x538] sm:$0x1]
      %v362 = vld [vmem:[%s1] sm:$0xff]
      %v363 = vld [vmem:[%s1 + $0x8] sm:$0xff]
      %v364 = vld [vmem:[%s1 + $0x10] sm:$0xff]
      %v365 = vld [vmem:[%s1 + $0x18] sm:$0xff]
      %v366 = vld [vmem:[%s1 + $0x20] sm:$0xff]
      %v367 = vld [vmem:[%s1 + $0x28] sm:$0xff]
      %v368 = vld [vmem:[%s1 + $0x30] sm:$0xff]
      %v369 = vld [vmem:[%s1 + $0x38] sm:$0xff]
      %v370 = vld [vmem:[%s1 + $0x40] sm:$0xff]
      %v371 = vld [vmem:[%s1 + $0x48] sm:$0xff]
      %v372 = vld [vmem:[%s1 + $0x50] sm:$0xff]
      %v373 = vld [vmem:[%s1 + $0x58] sm:$0xff]
      %v374 = vld [vmem:[%s1 + $0x60] sm:$0xff]
      %v375 = vld [vmem:[%s1 + $0x68] sm:$0xff]
      %v376 = vld [vmem:[%s1 + $0x70] sm:$0xff]
      %v377 = vld [vmem:[%s1 + $0x78] sm:$0xff]
      %v378 = vld [vmem:[%s1 + $0x80] sm:$0xff]
      %v379 = vld [vmem:[%s1 + $0x88] sm:$0xff]
      %v380 = vld [vmem:[%s1 + $0x90] sm:$0xff]
      %v381 = vld [vmem:[%s1 + $0x98] sm:$0xff]
      %v382 = vld [vmem:[%s1 + $0xa0] sm:$0xff]
      %v383 = vld [vmem:[%s1 + $0xa8] sm:$0xff]
      %v384 = vld [vmem:[%s1 + $0xb0] sm:$0xff]
      %v385 = vld [vmem:[%s1 + $0xb8] sm:$0xff]
      %v386 = vld [vmem:[%s1 + $0xc0] sm:$0xff]
      %v387 = vld [vmem:[%s1 + $0xc8] sm:$0xff]
      %v388 = vld [vmem:[%s1 + $0xd0] sm:$0xff]
      %v389 = vld [vmem:[%s1 + $0xd8] sm:$0xff]
      %v390 = vld [vmem:[%s1 + $0xe0] sm:$0xff]
      %v391 = vld [vmem:[%s1 + $0xe8] sm:$0xff]
      %v392 = vld [vmem:[%s1 + $0xf0] sm:$0xff]
      %v393 = vld [vmem:[%s1 + $0xf8] sm:$0xff]
      %v394 = vld [vmem:[%s1 + $0x100] sm:$0xff]
      %v395 = vld [vmem:[%s1 + $0x108] sm:$0xff]
      %v396 = vld [vmem:[%s1 + $0x110] sm:$0xff]
      %v397 = vld [vmem:[%s1 + $0x118] sm:$0xff]
      %v398 = vld [vmem:[%s1 + $0x120] sm:$0xff]
      %v399 = vld [vmem:[%s1 + $0x128] sm:$0xff]
      %v400 = vld [vmem:[%s1 + $0x130] sm:$0xff]
      %v401 = vld [vmem:[%s1 + $0x138] sm:$0xff]
      %v402 = vld [vmem:[%s1 + $0x140] sm:$0xff]
      %v403 = vld [vmem:[%s1 + $0x148] sm:$0xff]
      %v404 = vld [vmem:[%s1 + $0x150] sm:$0xff]
      %v405 = vld [vmem:[%s1 + $0x158] sm:$0xff]
      %v406 = vld [vmem:[%s1 + $0x160] sm:$0xff]
      %v407 = vld [vmem:[%s1 + $0x168] sm:$0xff]
      %v408 = vld [vmem:[%s1 + $0x170] sm:$0xff]
      %v409 = vld [vmem:[%s1 + $0x178] sm:$0xff]
      %v410 = vld [vmem:[%s1 + $0x180] sm:$0xff]
      %v411 = vld [vmem:[%s1 + $0x188] sm:$0xff]
      %v412 = vld [vmem:[%s1 + $0x190] sm:$0xff]
      %v413 = vld [vmem:[%s1 + $0x198] sm:$0xff]
      %v414 = vld [vmem:[%s1 + $0x1a0] sm:$0xff]
      %v415 = vld [vmem:[%s1 + $0x1a8] sm:$0xff]
      %v416 = vld [vmem:[%s1 + $0x1b0] sm:$0xff]
      %v417 = vld [vmem:[%s1 + $0x1b8] sm:$0xff]
      %v418 = vld [vmem:[%s1 + $0x1c0] sm:$0xff]
      %v419 = vld [vmem:[%s1 + $0x1c8] sm:$0xff]
      %v420 = vld [vmem:[%s1 + $0x1d0] sm:$0xff]
      %v421 = vld [vmem:[%s1 + $0x1d8] sm:$0xff]
      %v422 = vld [vmem:[%s1 + $0x1e0] sm:$0xff]
      %v423 = vld [vmem:[%s1 + $0x1e8] sm:$0xff]
      %v424 = vld [vmem:[%s1 + $0x1f0] sm:$0xff]
      %v425 = vld [vmem:[%s1 + $0x1f8] sm:$0xff]
      %v426 = vld [vmem:[%s1 + $0x200] sm:$0xff]
      %v427 = vld [vmem:[%s1 + $0x208] sm:$0xff]
      %v428 = vld [vmem:[%s1 + $0x210] sm:$0xff]
      %v429 = vld [vmem:[%s1 + $0x218] sm:$0xff]
      %v430 = vld [vmem:[%s1 + $0x220] sm:$0xff]
      %v431 = vld [vmem:[%s1 + $0x228] sm:$0xff]
      %v432 = vld [vmem:[%s1 + $0x230] sm:$0xff]
      %v433 = vld [vmem:[%s1 + $0x238] sm:$0xff]
      %v434 = vld [vmem:[%s1 + $0x240] sm:$0xff]
      %v435 = vld [vmem:[%s1 + $0x248] sm:$0xff]
      %v436 = vld [vmem:[%s1 + $0x250] sm:$0xff]
      %v437 = vld [vmem:[%s1 + $0x258] sm:$0xff]
      %v438 = vld [vmem:[%s1 + $0x260] sm:$0xff]
      %v439 = vld [vmem:[%s1 + $0x268] sm:$0xff]
      %v440 = vld [vmem:[%s1 + $0x270] sm:$0xff]
      %v441 = vld [vmem:[%s1 + $0x278] sm:$0xff]
      %v442 = vld [vmem:[%s1 + $0x280] sm:$0xff]
      %v443 = vld [vmem:[%s1 + $0x288] sm:$0xff]
      %v444 = vld [vmem:[%s1 + $0x290] sm:$0xff]
      %v445 = vld [vmem:[%s1 + $0x298] sm:$0xff]
      %v446 = vld [vmem:[%s1 + $0x2a0] sm:$0xff]
      %v447 = vld [vmem:[%s1 + $0x2a8] sm:$0xff]
      %v448 = vld [vmem:[%s1 + $0x2b0] sm:$0xff]
      %v449 = vld [vmem:[%s1 + $0x2b8] sm:$0xff]
      %v450 = vld [vmem:[%s1 + $0x2c0] sm:$0xff]
      %v451 = vld [vmem:[%s1 + $0x2c8] sm:$0xff]
      %v452 = vld [vmem:[%s1 + $0x2d0] sm:$0xff]
      %v453 = vld [vmem:[%s1 + $0x2d8] sm:$0xff]
      %v454 = vld [vmem:[%s1 + $0x2e0] sm:$0xff]
      %v455 = vld [vmem:[%s1 + $0x2e8] sm:$0xff]
      %v456 = vld [vmem:[%s1 + $0x2f0] sm:$0xff]
      %v457 = vld [vmem:[%s1 + $0x2f8] sm:$0xff]
      %v458 = vld [vmem:[%s1 + $0x300] sm:$0xff]
      %v459 = vld [vmem:[%s1 + $0x308] sm:$0xff]
      %v460 = vld [vmem:[%s1 + $0x310] sm:$0xff]
      %v461 = vld [vmem:[%s1 + $0x318] sm:$0xff]
      %v462 = vld [vmem:[%s1 + $0x320] sm:$0xff]
      %v463 = vld [vmem:[%s1 + $0x328] sm:$0xff]
      %v464 = vld [vmem:[%s1 + $0x330] sm:$0xff]
      %v465 = vld [vmem:[%s1 + $0x338] sm:$0xff]
      %v466 = vld [vmem:[%s1 + $0x340] sm:$0xff]
      %v467 = vld [vmem:[%s1 + $0x348] sm:$0xff]
      %v468 = vld [vmem:[%s1 + $0x350] sm:$0xff]
      %v469 = vld [vmem:[%s1 + $0x358] sm:$0xff]
      %v470 = vld [vmem:[%s1 + $0x360] sm:$0xff]
      %v471 = vld [vmem:[%s1 + $0x368] sm:$0xff]
      %v472 = vld [vmem:[%s1 + $0x370] sm:$0xff]
      %v473 = vld [vmem:[%s1 + $0x378] sm:$0xff]
      %v474 = vld [vmem:[%s1 + $0x380] sm:$0xff]
      %v475 = vld [vmem:[%s1 + $0x388] sm:$0xff]
      %v476 = vld [vmem:[%s1 + $0x390] sm:$0xff]
      %v477 = vld [vmem:[%s1 + $0x398] sm:$0xff]
      %v478 = vld [vmem:[%s1 + $0x3a0] sm:$0xff]
      %v479 = vld [vmem:[%s1 + $0x3a8] sm:$0xff]
      %v480 = vld [vmem:[%s1 + $0x3b0] sm:$0xff]
      %v481 = vld [vmem:[%s1 + $0x3b8] sm:$0xff]
      %v482 = vld [vmem:[%s1 + $0x3c0] sm:$0xff]
      %v483 = vld [vmem:[%s1 + $0x3c8] sm:$0xff]
      %v484 = vld [vmem:[%s1 + $0x3d0] sm:$0xff]
      %v485 = vld [vmem:[%s1 + $0x3d8] sm:$0xff]
      %v486 = vld [vmem:[%s1 + $0x3e0] sm:$0xff]
      %v487 = vld [vmem:[%s1 + $0x3e8] sm:$0xff]
      %v488 = vld [vmem:[%s1 + $0x3f0] sm:$0xff]
      %v489 = vld [vmem:[%s1 + $0x3f8] sm:$0xff]
      %v490 = vld [vmem:[%s1 + $0x400] sm:$0xff]
      %v491 = vld [vmem:[%s1 + $0x408] sm:$0xff]
      %v492 = vld [vmem:[%s1 + $0x410] sm:$0xff]
      %v493 = vld [vmem:[%s1 + $0x418] sm:$0xff]
      %v494 = vld [vmem:[%s1 + $0x420] sm:$0xff]
      %v495 = vld [vmem:[%s1 + $0x428] sm:$0xff]
      %v496 = vld [vmem:[%s1 + $0x430] sm:$0xff]
      %v497 = vld [vmem:[%s1 + $0x438] sm:$0xff]
      %v498 = vld [vmem:[%s1 + $0x440] sm:$0xff]
      %v499 = vld [vmem:[%s1 + $0x448] sm:$0xff]
      %v500 = vld [vmem:[%s1 + $0x450] sm:$0xff]
      %v501 = vld [vmem:[%s1 + $0x458] sm:$0xff]
      %v502 = vld [vmem:[%s1 + $0x460] sm:$0xff]
      %v503 = vld [vmem:[%s1 + $0x468] sm:$0xff]
      %v504 = vld [vmem:[%s1 + $0x470] sm:$0xff]
      %v505 = vld [vmem:[%s1 + $0x478] sm:$0xff]
      %v506 = vld [vmem:[%s1 + $0x480] sm:$0xff]
      %v507 = vld [vmem:[%s1 + $0x488] sm:$0xff]
      %v508 = vld [vmem:[%s1 + $0x490] sm:$0xff]
      %v509 = vld [vmem:[%s1 + $0x498] sm:$0xff]
      %v510 = vld [vmem:[%s1 + $0x4a0] sm:$0xff]
      %v511 = vld [vmem:[%s1 + $0x4a8] sm:$0xff]
      %v512 = vld [vmem:[%s1 + $0x4b0] sm:$0xff]
      %v513 = vld [vmem:[%s1 + $0x4b8] sm:$0xff]
      %v514 = vld [vmem:[%s1 + $0x4c0] sm:$0xff]
      %v515 = vld [vmem:[%s1 + $0x4c8] sm:$0xff]
      %v516 = vld [vmem:[%s1 + $0x4d0] sm:$0xff]
      %v517 = vld [vmem:[%s1 + $0x4d8] sm:$0xff]
      %v518 = vld [vmem:[%s1 + $0x4e0] sm:$0xff]
      %v519 = vld [vmem:[%s1 + $0x4e8] sm:$0xff]
      %v520 = vld [vmem:[%s1 + $0x4f0] sm:$0xff]
      %v521 = vld [vmem:[%s1 + $0x4f8] sm:$0xff]
      %v522 = vld [vmem:[%s1 + $0x500] sm:$0xff]
      %v523 = vld [vmem:[%s1 + $0x508] sm:$0xff]
      %v524 = vld [vmem:[%s1 + $0x510] sm:$0xff]
      %v525 = vld [vmem:[%s1 + $0x518] sm:$0xff]
      %v526 = vld [vmem:[%s1 + $0x520] sm:$0xff]
      %v527 = vld [vmem:[%s1 + $0x528] sm:$0xff]
      %v528 = vld [vmem:[%s1 + $0x530] sm:$0xff]
      %v529 = vld [vmem:[%s1 + $0x538] sm:$0xff]
      %v530 = vld [vmem:[%s1 + $0x540] sm:$0xff]
      %v531 = vld [vmem:[%s1 + $0x548] sm:$0xff]
      %v532 = vld [vmem:[%s1 + $0x550] sm:$0xff]
      %v533 = vld [vmem:[%s1 + $0x558] sm:$0xff]
      %v534 = vld [vmem:[%s1 + $0x560] sm:$0xff]
      %v535 = vld [vmem:[%s1 + $0x568] sm:$0xff]
      %v536 = vld [vmem:[%s1 + $0x570] sm:$0xff]
      %v537 = vld [vmem:[%s1 + $0x578] sm:$0xff]
      %v538 = vld [vmem:[%s1 + $0x580] sm:$0xff]
      %v539 = vld [vmem:[%s1 + $0x588] sm:$0xff]
      %v540 = vld [vmem:[%s1 + $0x590] sm:$0xff]
      %v541 = vld [vmem:[%s1 + $0x598] sm:$0xff]
      %v542 = vld [vmem:[%s1 + $0x5a0] sm:$0xff]
      %v543 = vld [vmem:[%s1 + $0x5a8] sm:$0xff]
      %v544 = vld [vmem:[%s1 + $0x5b0] sm:$0xff]
      %v545 = vld [vmem:[%s1 + $0x5b8] sm:$0xff]
      %v546 = vld [vmem:[%s1 + $0x5c0] sm:$0xff]
      %v547 = vld [vmem:[%s1 + $0x5c8] sm:$0xff]
      %v548 = vld [vmem:[%s1 + $0x5d0] sm:$0xff]
      %v549 = vld [vmem:[%s1 + $0x5d8] sm:$0xff]
      %v550 = vld [vmem:[%s1 + $0x5e0] sm:$0xff]
      %v551 = vld [vmem:[%s1 + $0x5e8] sm:$0xff]
      %v552 = vld [vmem:[%s1 + $0x5f0] sm:$0xff]
      %v553 = vld [vmem:[%s1 + $0x5f8] sm:$0xff]
      %v554 = vld [vmem:[%s1 + $0x600] sm:$0xff]
      %v555 = vld [vmem:[%s1 + $0x608] sm:$0xff]
      %v556 = vld [vmem:[%s1 + $0x610] sm:$0xff]
      %v557 = vld [vmem:[%s1 + $0x618] sm:$0xff]
      %v558 = vld [vmem:[%s1 + $0x620] sm:$0xff]
      %v559 = vld [vmem:[%s1 + $0x628] sm:$0xff]
      %v560 = vld [vmem:[%s1 + $0x630] sm:$0xff]
      %v561 = vld [vmem:[%s1 + $0x638] sm:$0xff]
      %v562 = vld [vmem:[%s1 + $0x640] sm:$0xff]
      %v563 = vld [vmem:[%s1 + $0x648] sm:$0xff]
      %v564 = vld [vmem:[%s1 + $0x650] sm:$0xff]
      %v565 = vld [vmem:[%s1 + $0x658] sm:$0xff]
      %v566 = vld [vmem:[%s1 + $0x660] sm:$0xff]
      %v567 = vld [vmem:[%s1 + $0x668] sm:$0xff]
      %v568 = vld [vmem:[%s1 + $0x670] sm:$0xff]
      %v569 = vld [vmem:[%s1 + $0x678] sm:$0xff]
      %v570 = vld [vmem:[%s1 + $0x680] sm:$0xff]
      %v571 = vld [vmem:[%s1 + $0x688] sm:$0xff]
      %v572 = vld [vmem:[%s1 + $0x690] sm:$0xff]
      %v573 = vld [vmem:[%s1 + $0x698] sm:$0xff]
      %v574 = vld [vmem:[%s1 + $0x6a0] sm:$0xff]
      %v575 = vld [vmem:[%s1 + $0x6a8] sm:$0xff]
      %v576 = vld [vmem:[%s1 + $0x6b0] sm:$0xff]
      %v577 = vld [vmem:[%s1 + $0x6b8] sm:$0xff]
      %v578 = vld [vmem:[%s1 + $0x6c0] sm:$0xff]
      %v579 = vld [vmem:[%s1 + $0x6c8] sm:$0xff]
      %v580 = vld [vmem:[%s1 + $0x6d0] sm:$0xff]
      %v581 = vld [vmem:[%s1 + $0x6d8] sm:$0xff]
      %v582 = vld [vmem:[%s1 + $0x6e0] sm:$0xff]
      %v583 = vld [vmem:[%s1 + $0x6e8] sm:$0xff]
      %v584 = vld [vmem:[%s1 + $0x6f0] sm:$0xff]
      %v585 = vld [vmem:[%s1 + $0x6f8] sm:$0xff]
      %v586 = vld [vmem:[%s1 + $0x700] sm:$0xff]
      %v587 = vld [vmem:[%s1 + $0x708] sm:$0xff]
      %v588 = vld [vmem:[%s1 + $0x710] sm:$0xff]
      %v589 = vld [vmem:[%s1 + $0x718] sm:$0xff]
      %v590 = vld [vmem:[%s1 + $0x720] sm:$0xff]
      %v591 = vld [vmem:[%s1 + $0x728] sm:$0xff]
      %v592 = vld [vmem:[%s1 + $0x730] sm:$0xff]
      %v593 = vld [vmem:[%s1 + $0x738] sm:$0xff]
      %v594 = vld [vmem:[%s1 + $0x740] sm:$0xff]
      %v595 = vld [vmem:[%s1 + $0x748] sm:$0xff]
      %v596 = vld [vmem:[%s1 + $0x750] sm:$0xff]
      %v597 = vld [vmem:[%s1 + $0x758] sm:$0xff]
      %v598 = vld [vmem:[%s1 + $0x760] sm:$0xff]
      %v599 = vld [vmem:[%s1 + $0x768] sm:$0xff]
      %v600 = vld [vmem:[%s1 + $0x770] sm:$0xff]
      %v601 = vld [vmem:[%s1 + $0x778] sm:$0xff]
      %v602 = vld [vmem:[%s1 + $0x780] sm:$0xff]
      %v603 = vld [vmem:[%s1 + $0x788] sm:$0xff]
      %v604 = vld [vmem:[%s1 + $0x790] sm:$0xff]
      %v605 = vld [vmem:[%s1 + $0x798] sm:$0xff]
      %v606 = vld [vmem:[%s1 + $0x7a0] sm:$0xff]
      %v607 = vld [vmem:[%s1 + $0x7a8] sm:$0xff]
      %v608 = vld [vmem:[%s1 + $0x7b0] sm:$0xff]
      %v609 = vld [vmem:[%s1 + $0x7b8] sm:$0xff]
      %v610 = vld [vmem:[%s1 + $0x7c0] sm:$0xff]
      %v611 = vld [vmem:[%s1 + $0x7c8] sm:$0xff]
      %v612 = vld [vmem:[%s1 + $0x7d0] sm:$0xff]
      %v613 = vld [vmem:[%s1 + $0x7d8] sm:$0xff]
      %v614 = vld [vmem:[%s1 + $0x7e0] sm:$0xff]
      %v615 = vld [vmem:[%s1 + $0x7e8] sm:$0xff]
      %v616 = vld [vmem:[%s1 + $0x7f0] sm:$0xff]
      %v617 = vld [vmem:[%s1 + $0x7f8] sm:$0xff]
      %v618 = vld [vmem:[%s1 + $0x800] sm:$0xff]
      %v619 = vld [vmem:[%s1 + $0x808] sm:$0xff]
      %v620 = vld [vmem:[%s1 + $0x810] sm:$0xff]
      %v621 = vld [vmem:[%s1 + $0x818] sm:$0xff]
      %v622 = vld [vmem:[%s1 + $0x820] sm:$0xff]
      %v623 = vld [vmem:[%s1 + $0x828] sm:$0xff]
      %v624 = vld [vmem:[%s1 + $0x830] sm:$0xff]
      %v625 = vld [vmem:[%s1 + $0x838] sm:$0xff]
      %v626 = vld [vmem:[%s1 + $0x840] sm:$0xff]
      %v627 = vld [vmem:[%s1 + $0x848] sm:$0xff]
      %v628 = vld [vmem:[%s1 + $0x850] sm:$0xff]
      %v629 = vld [vmem:[%s1 + $0x858] sm:$0xff]
      %v630 = vld [vmem:[%s1 + $0x860] sm:$0xff]
      %v631 = vld [vmem:[%s1 + $0x868] sm:$0xff]
      %v632 = vld [vmem:[%s1 + $0x870] sm:$0xff]
      %v633 = vld [vmem:[%s1 + $0x878] sm:$0xff]
      %v634 = vld [vmem:[%s1 + $0x880] sm:$0xff]
      %v635 = vld [vmem:[%s1 + $0x888] sm:$0xff]
      %v636 = vld [vmem:[%s1 + $0x890] sm:$0xff]
      %v637 = vld [vmem:[%s1 + $0x898] sm:$0xff]
      %v638 = vld [vmem:[%s1 + $0x8a0] sm:$0xff]
      %v639 = vld [vmem:[%s1 + $0x8a8] sm:$0xff]
      %v640 = vld [vmem:[%s1 + $0x8b0] sm:$0xff]
      %v641 = vld [vmem:[%s1 + $0x8b8] sm:$0xff]
      %v642 = vld [vmem:[%s1 + $0x8c0] sm:$0xff]
      %v643 = vld [vmem:[%s1 + $0x8c8] sm:$0xff]
      %v644 = vld [vmem:[%s1 + $0x8d0] sm:$0xff]
      %v645 = vld [vmem:[%s1 + $0x8d8] sm:$0xff]
      %v646 = vld [vmem:[%s1 + $0x8e0] sm:$0xff]
      %v647 = vld [vmem:[%s1 + $0x8e8] sm:$0xff]
      %v648 = vld [vmem:[%s1 + $0x8f0] sm:$0xff]
      %v649 = vld [vmem:[%s1 + $0x8f8] sm:$0xff]
      %v650 = vld [vmem:[%s1 + $0x900] sm:$0xff]
      %v651 = vld [vmem:[%s1 + $0x908] sm:$0xff]
      %v652 = vld [vmem:[%s1 + $0x910] sm:$0xff]
      %v653 = vld [vmem:[%s1 + $0x918] sm:$0xff]
      %v654 = vld [vmem:[%s1 + $0x920] sm:$0xff]
      %v655 = vld [vmem:[%s1 + $0x928] sm:$0xff]
      %v656 = vld [vmem:[%s1 + $0x930] sm:$0xff]
      %v657 = vld [vmem:[%s1 + $0x938] sm:$0xff]
      %v658 = vld [vmem:[%s1 + $0x940] sm:$0xff]
      %v659 = vld [vmem:[%s1 + $0x948] sm:$0xff]
      %v660 = vld [vmem:[%s1 + $0x950] sm:$0xff]
      %v661 = vld [vmem:[%s1 + $0x958] sm:$0xff]
      %v662 = vld [vmem:[%s1 + $0x960] sm:$0xff]
      %v663 = vld [vmem:[%s1 + $0x968] sm:$0xff]
      %v664 = vld [vmem:[%s1 + $0x970] sm:$0xff]
      %v665 = vld [vmem:[%s1 + $0x978] sm:$0xff]
      %v666 = vld [vmem:[%s1 + $0x980] sm:$0xff]
      %v667 = vld [vmem:[%s1 + $0x988] sm:$0xff]
      %v668 = vld [vmem:[%s1 + $0x990] sm:$0xff]
      %v669 = vld [vmem:[%s1 + $0x998] sm:$0xff]
      %v670 = vld [vmem:[%s1 + $0x9a0] sm:$0xff]
      %v671 = vld [vmem:[%s1 + $0x9a8] sm:$0xff]
      %v672 = vld [vmem:[%s1 + $0x9b0] sm:$0xff]
      %v673 = vld [vmem:[%s1 + $0x9b8] sm:$0xff]
      %v674 = vld [vmem:[%s1 + $0x9c0] sm:$0xff]
      %v675 = vld [vmem:[%s1 + $0x9c8] sm:$0xff]
      %v676 = vld [vmem:[%s1 + $0x9d0] sm:$0xff]
      %v677 = vld [vmem:[%s1 + $0x9d8] sm:$0xff]
      %v678 = vld [vmem:[%s1 + $0x9e0] sm:$0xff]
      %v679 = vld [vmem:[%s1 + $0x9e8] sm:$0xff]
      %v680 = vld [vmem:[%s1 + $0x9f0] sm:$0xff]
      %v681 = vld [vmem:[%s1 + $0x9f8] sm:$0xff]
      %v682 = vld [vmem:[%s1 + $0xa00] sm:$0xff]
      %v683 = vld [vmem:[%s1 + $0xa08] sm:$0xff]
      %v684 = vld [vmem:[%s1 + $0xa10] sm:$0xff]
      %v685 = vld [vmem:[%s1 + $0xa18] sm:$0xff]
      %v686 = vld [vmem:[%s1 + $0xa20] sm:$0xff]
      %v687 = vld [vmem:[%s1 + $0xa28] sm:$0xff]
      %v688 = vld [vmem:[%s1 + $0xa30] sm:$0xff]
      %v689 = vld [vmem:[%s1 + $0xa38] sm:$0xff]
      %v690 = vld [vmem:[%s1 + $0xa40] sm:$0xff]
      %v691 = vld [vmem:[%s1 + $0xa48] sm:$0xff]
      %v692 = vld [vmem:[%s1 + $0xa50] sm:$0xff]
      %v693 = vld [vmem:[%s1 + $0xa58] sm:$0xff]
      %v694 = vld [vmem:[%s1 + $0xa60] sm:$0xff]
      %v695 = vld [vmem:[%s1 + $0xa68] sm:$0xff]
      %v696 = vld [vmem:[%s1 + $0xa70] sm:$0xff]
      %v697 = vld [vmem:[%s1 + $0xa78] sm:$0xff]
      %v698 = vld [vmem:[%s1 + $0xa80] sm:$0xff]
      %v699 = vld [vmem:[%s1 + $0xa88] sm:$0xff]
      %v700 = vld [vmem:[%s1 + $0xa90] sm:$0xff]
      %v701 = vld [vmem:[%s1 + $0xa98] sm:$0xff]
      %v702 = vld [vmem:[%s1 + $0xaa0] sm:$0xff]
      %v703 = vld [vmem:[%s1 + $0xaa8] sm:$0xff]
      %v704 = vld [vmem:[%s1 + $0xab0] sm:$0xff]
      %v705 = vld [vmem:[%s1 + $0xab8] sm:$0xff]
      %v706 = vld [vmem:[%s1 + $0xac0] sm:$0xff]
      %v707 = vld [vmem:[%s1 + $0xac8] sm:$0xff]
      %v708 = vld [vmem:[%s1 + $0xad0] sm:$0xff]
      %v709 = vld [vmem:[%s1 + $0xad8] sm:$0xff]
      %v710 = vld [vmem:[%s1 + $0xae0] sm:$0xff]
      %v711 = vld [vmem:[%s1 + $0xae8] sm:$0xff]
      %v712 = vld [vmem:[%s1 + $0xaf0] sm:$0xff]
      %v713 = vld [vmem:[%s1 + $0xaf8] sm:$0xff]
      %v714 = vld [vmem:[%s1 + $0xb00] sm:$0xff]
      %v715 = vld [vmem:[%s1 + $0xb08] sm:$0xff]
      %v716 = vld [vmem:[%s1 + $0xb10] sm:$0xff]
      %v717 = vld [vmem:[%s1 + $0xb18] sm:$0xff]
      %v718 = vld [vmem:[%s1 + $0xb20] sm:$0xff]
      %v719 = vld [vmem:[%s1 + $0xb28] sm:$0xff]
      %v720 = vld [vmem:[%s1 + $0xb30] sm:$0xff]
      %v721 = vld [vmem:[%s1 + $0xb38] sm:$0xff]
      %v722 = vld [vmem:[%s1 + $0xb40] sm:$0xff]
      %v723 = vld [vmem:[%s1 + $0xb48] sm:$0xff]
      %v724 = vld [vmem:[%s1 + $0xb50] sm:$0xff]
      %v725 = vld [vmem:[%s1 + $0xb58] sm:$0xff]
      %v726 = vld [vmem:[%s1 + $0xb60] sm:$0xff]
      %v727 = vld [vmem:[%s1 + $0xb68] sm:$0xff]
      %v728 = vld [vmem:[%s1 + $0xb70] sm:$0xff]
      %v729 = vld [vmem:[%s1 + $0xb78] sm:$0xff]
      %v730 = vld [vmem:[%s1 + $0xb80] sm:$0xff]
      %v731 = vld [vmem:[%s1 + $0xb88] sm:$0xff]
      %v732 = vld [vmem:[%s1 + $0xb90] sm:$0xff]
      %v733 = vld [vmem:[%s1 + $0xb98] sm:$0xff]
      %v734 = vld [vmem:[%s1 + $0xba0] sm:$0xff]
      %v735 = vld [vmem:[%s1 + $0xba8] sm:$0xff]
      %v736 = vld [vmem:[%s1 + $0xbb0] sm:$0xff]
      %v737 = vld [vmem:[%s1 + $0xbb8] sm:$0xff]
      %v738 = vld [vmem:[%s1 + $0xbc0] sm:$0xff]
      %v739 = vld [vmem:[%s1 + $0xbc8] sm:$0xff]
      %v740 = vld [vmem:[%s1 + $0xbd0] sm:$0xff]
      %v741 = vld [vmem:[%s1 + $0xbd8] sm:$0xff]
      %v742 = vld [vmem:[%s1 + $0xbe0] sm:$0xff]
      %v743 = vld [vmem:[%s1 + $0xbe8] sm:$0xff]
      %v744 = vld [vmem:[%s1 + $0xbf0] sm:$0xff]
      %v745 = vld [vmem:[%s1 + $0xbf8] sm:$0xff]
      %746 = vmatprep.subr.mxu0 0.0
      %747 = vmatpush1.msra.mxu0 %v377
      %748 = vmatprep.subr.mxu0 0.0
      %749 = vmatpush1.msra.mxu0 %v376
      %750 = vmatprep.subr.mxu0 0.0
      %751 = vmatpush1.msra.mxu0 %v375
      %752 = vmatprep.subr.mxu0 0.0
      %753 = vmatpush1.msra.mxu0 %v374
      %754 = vmatprep.subr.mxu0 0.0
      %755 = vmatpush1.msra.mxu0 %v373
      %756 = vmatprep.subr.mxu0 0.0
      %757 = vmatpush1.msra.mxu0 %v372
      %758 = vmatprep.subr.mxu0 0.0
      %759 = vmatpush1.msra.mxu0 %v371
      %760 = vmatprep.subr.mxu0 0.0
      %761 = vmatpush1.msra.mxu0 %v370
      %762 = vmatprep.subr.mxu0 0.0
      %763 = vmatpush1.msra.mxu0 %v369
      %764 = vmatprep.subr.mxu0 0.0
      %765 = vmatpush1.msra.mxu0 %v368
      %766 = vmatprep.subr.mxu0 0.0
      %767 = vmatpush1.msra.mxu0 %v367
      %768 = vmatprep.subr.mxu0 0.0
      %769 = vmatpush1.msra.mxu0 %v366
      %770 = vmatprep.subr.mxu0 0.0
      %771 = vmatpush1.msra.mxu0 %v365
      %772 = vmatprep.subr.mxu0 0.0
      %773 = vmatpush1.msra.mxu0 %v364
      %774 = vmatprep.subr.mxu0 0.0
      %775 = vmatpush1.msra.mxu0 %v363
      %776 = vmatprep.subr.mxu0 0.0
      %777 = vmatpush1.msra.mxu0 %v362
      %778 = vmatprep.subr.mxu0 0.0
      %779 = vmatpush2.msra.mxu0 %v393
      %780 = vmatprep.subr.mxu0 0.0
      %781 = vmatpush2.msra.mxu0 %v392
      %782 = vmatprep.subr.mxu0 0.0
      %783 = vmatpush2.msra.mxu0 %v391
      %784 = vmatprep.subr.mxu0 0.0
      %785 = vmatpush2.msra.mxu0 %v390
      %786 = vmatprep.subr.mxu0 0.0
      %787 = vmatpush2.msra.mxu0 %v389
      %788 = vmatprep.subr.mxu0 0.0
      %789 = vmatpush2.msra.mxu0 %v388
      %790 = vmatprep.subr.mxu0 0.0
      %791 = vmatpush2.msra.mxu0 %v387
      %792 = vmatprep.subr.mxu0 0.0
      %793 = vmatpush2.msra.mxu0 %v386
      %794 = vmatprep.subr.mxu0 0.0
      %795 = vmatpush2.msra.mxu0 %v385
      %796 = vmatprep.subr.mxu0 0.0
      %797 = vmatpush2.msra.mxu0 %v384
      %798 = vmatprep.subr.mxu0 0.0
      %799 = vmatpush2.msra.mxu0 %v383
      %800 = vmatprep.subr.mxu0 0.0
      %801 = vmatpush2.msra.mxu0 %v382
      %802 = vmatprep.subr.mxu0 0.0
      %803 = vmatpush2.msra.mxu0 %v381
      %804 = vmatprep.subr.mxu0 0.0
      %805 = vmatpush2.msra.mxu0 %v380
      %806 = vmatprep.subr.mxu0 0.0
      %807 = vmatpush2.msra.mxu0 %v379
      %808 = vmatprep.subr.mxu0 0.0
      %809 = vmatpush2.msra.mxu0 %v378
      %810 = vmatprep.mubr.f32.mxu0 %v195
      %811 = vmatmul.mubr.f32.gmra.mxu0 %v194
      %v812 = vpop.f32.mrf.mxu0
      %v813 = vadd.f32 0.0, %v812
      %v814 = vpop.f32.mrf.mxu0
      %815 = vmatprep.mubr.f32.mxu0 %v219
      %816 = vmatmul.mubr.f32.gmra.mxu0 %v218
      %v817 = vpop.f32.mrf.mxu0
      %v818 = vadd.f32 0.0, %v817
      %v819 = vpop.f32.mrf.mxu0
      %820 = vmatprep.mubr.f32.mxu0 %v243
      %821 = vmatmul.mubr.f32.gmra.mxu0 %v242
      %v822 = vpop.f32.mrf.mxu0
      %v823 = vadd.f32 0.0, %v822
      %v824 = vpop.f32.mrf.mxu0
      %825 = vmatprep.mubr.f32.mxu0 %v267
      %826 = vmatmul.mubr.f32.gmra.mxu0 %v266
      %v827 = vpop.f32.mrf.mxu0
      %v828 = vadd.f32 0.0, %v827
      %v829 = vpop.f32.mrf.mxu0
      %830 = vmatprep.mubr.f32.mxu0 %v291
      %831 = vmatmul.mubr.f32.gmra.mxu0 %v290
      %v832 = vpop.f32.mrf.mxu0
      %v833 = vadd.f32 0.0, %v832
      %v834 = vpop.f32.mrf.mxu0
      %835 = vmatprep.mubr.f32.mxu0 %v315
      %836 = vmatmul.mubr.f32.gmra.mxu0 %v314
      %v837 = vpop.f32.mrf.mxu0
      %v838 = vadd.f32 0.0, %v837
      %v839 = vpop.f32.mrf.mxu0
      %840 = vmatprep.mubr.f32.mxu0 %v339
      %841 = vmatmul.mubr.f32.gmra.mxu0 %v338
      %v842 = vpop.f32.mrf.mxu0
      %v843 = vadd.f32 0.0, %v842
      %v844 = vpop.f32.mrf.mxu0
      %845 = vdwg.mxu0
      %846 = vmatprep.subr.mxu0 0.0
      %847 = vmatpush1.msra.mxu0 %v409
      %848 = vmatprep.subr.mxu0 0.0
      %849 = vmatpush1.msra.mxu0 %v408
      %850 = vmatprep.subr.mxu0 0.0
      %851 = vmatpush1.msra.mxu0 %v407
      %852 = vmatprep.subr.mxu0 0.0
      %853 = vmatpush1.msra.mxu0 %v406
      %854 = vmatprep.subr.mxu0 0.0
      %855 = vmatpush1.msra.mxu0 %v405
      %856 = vmatprep.subr.mxu0 0.0
      %857 = vmatpush1.msra.mxu0 %v404
      %858 = vmatprep.subr.mxu0 0.0
      %859 = vmatpush1.msra.mxu0 %v403
      %860 = vmatprep.subr.mxu0 0.0
      %861 = vmatpush1.msra.mxu0 %v402
      %862 = vmatprep.subr.mxu0 0.0
      %863 = vmatpush1.msra.mxu0 %v401
      %864 = vmatprep.subr.mxu0 0.0
      %865 = vmatpush1.msra.mxu0 %v400
      %866 = vmatprep.subr.mxu0 0.0
      %867 = vmatpush1.msra.mxu0 %v399
      %868 = vmatprep.subr.mxu0 0.0
      %869 = vmatpush1.msra.mxu0 %v398
      %870 = vmatprep.subr.mxu0 0.0
      %871 = vmatpush1.msra.mxu0 %v397
      %872 = vmatprep.subr.mxu0 0.0
      %873 = vmatpush1.msra.mxu0 %v396
      %874 = vmatprep.subr.mxu0 0.0
      %875 = vmatpush1.msra.mxu0 %v395
      %876 = vmatprep.subr.mxu0 0.0
      %877 = vmatpush1.msra.mxu0 %v394
      %878 = vmatprep.subr.mxu0 0.0
      %879 = vmatpush2.msra.mxu0 %v425
      %880 = vmatprep.subr.mxu0 0.0
      %881 = vmatpush2.msra.mxu0 %v424
      %882 = vmatprep.subr.mxu0 0.0
      %883 = vmatpush2.msra.mxu0 %v423
      %884 = vmatprep.subr.mxu0 0.0
      %885 = vmatpush2.msra.mxu0 %v422
      %886 = vmatprep.subr.mxu0 0.0
      %887 = vmatpush2.msra.mxu0 %v421
      %888 = vmatprep.subr.mxu0 0.0
      %889 = vmatpush2.msra.mxu0 %v420
      %890 = vmatprep.subr.mxu0 0.0
      %891 = vmatpush2.msra.mxu0 %v419
      %892 = vmatprep.subr.mxu0 0.0
      %893 = vmatpush2.msra.mxu0 %v418
      %894 = vmatprep.subr.mxu0 0.0
      %895 = vmatpush2.msra.mxu0 %v417
      %896 = vmatprep.subr.mxu0 0.0
      %897 = vmatpush2.msra.mxu0 %v416
      %898 = vmatprep.subr.mxu0 0.0
      %899 = vmatpush2.msra.mxu0 %v415
      %900 = vmatprep.subr.mxu0 0.0
      %901 = vmatpush2.msra.mxu0 %v414
      %902 = vmatprep.subr.mxu0 0.0
      %903 = vmatpush2.msra.mxu0 %v413
      %904 = vmatprep.subr.mxu0 0.0
      %905 = vmatpush2.msra.mxu0 %v412
      %906 = vmatprep.subr.mxu0 0.0
      %907 = vmatpush2.msra.mxu0 %v411
      %908 = vmatprep.subr.mxu0 0.0
      %909 = vmatpush2.msra.mxu0 %v410
      %910 = vmatprep.mubr.f32.mxu0 %v197
      %911 = vmatmul.mubr.f32.gmra.mxu0 %v196
      %v912 = vpop.f32.mrf.mxu0
      %v913 = vadd.f32 %v813, %v912
      %v914 = vpop.f32.mrf.mxu0
      %915 = vmatprep.mubr.f32.mxu0 %v221
      %916 = vmatmul.mubr.f32.gmra.mxu0 %v220
      %v917 = vpop.f32.mrf.mxu0
      %v918 = vadd.f32 %v818, %v917
      %v919 = vpop.f32.mrf.mxu0
      %920 = vmatprep.mubr.f32.mxu0 %v245
      %921 = vmatmul.mubr.f32.gmra.mxu0 %v244
      %v922 = vpop.f32.mrf.mxu0
      %v923 = vadd.f32 %v823, %v922
      %v924 = vpop.f32.mrf.mxu0
      %925 = vmatprep.mubr.f32.mxu0 %v269
      %926 = vmatmul.mubr.f32.gmra.mxu0 %v268
      %v927 = vpop.f32.mrf.mxu0
      %v928 = vadd.f32 %v828, %v927
      %v929 = vpop.f32.mrf.mxu0
      %930 = vmatprep.mubr.f32.mxu0 %v293
      %931 = vmatmul.mubr.f32.gmra.mxu0 %v292
      %v932 = vpop.f32.mrf.mxu0
      %v933 = vadd.f32 %v833, %v932
      %v934 = vpop.f32.mrf.mxu0
      %935 = vmatprep.mubr.f32.mxu0 %v317
      %936 = vmatmul.mubr.f32.gmra.mxu0 %v316
      %v937 = vpop.f32.mrf.mxu0
      %v938 = vadd.f32 %v838, %v937
      %v939 = vpop.f32.mrf.mxu0
      %940 = vmatprep.mubr.f32.mxu0 %v341
      %941 = vmatmul.mubr.f32.gmra.mxu0 %v340
      %v942 = vpop.f32.mrf.mxu0
      %v943 = vadd.f32 %v843, %v942
      %v944 = vpop.f32.mrf.mxu0
      %945 = vdwg.mxu0
      %946 = vmatprep.subr.mxu0 0.0
      %947 = vmatpush1.msra.mxu0 %v441
      %948 = vmatprep.subr.mxu0 0.0
      %949 = vmatpush1.msra.mxu0 %v440
      %950 = vmatprep.subr.mxu0 0.0
      %951 = vmatpush1.msra.mxu0 %v439
      %952 = vmatprep.subr.mxu0 0.0
      %953 = vmatpush1.msra.mxu0 %v438
      %954 = vmatprep.subr.mxu0 0.0
      %955 = vmatpush1.msra.mxu0 %v437
      %956 = vmatprep.subr.mxu0 0.0
      %957 = vmatpush1.msra.mxu0 %v436
      %958 = vmatprep.subr.mxu0 0.0
      %959 = vmatpush1.msra.mxu0 %v435
      %960 = vmatprep.subr.mxu0 0.0
      %961 = vmatpush1.msra.mxu0 %v434
      %962 = vmatprep.subr.mxu0 0.0
      %963 = vmatpush1.msra.mxu0 %v433
      %964 = vmatprep.subr.mxu0 0.0
      %965 = vmatpush1.msra.mxu0 %v432
      %966 = vmatprep.subr.mxu0 0.0
      %967 = vmatpush1.msra.mxu0 %v431
      %968 = vmatprep.subr.mxu0 0.0
      %969 = vmatpush1.msra.mxu0 %v430
      %970 = vmatprep.subr.mxu0 0.0
      %971 = vmatpush1.msra.mxu0 %v429
      %972 = vmatprep.subr.mxu0 0.0
      %973 = vmatpush1.msra.mxu0 %v428
      %974 = vmatprep.subr.mxu0 0.0
      %975 = vmatpush1.msra.mxu0 %v427
      %976 = vmatprep.subr.mxu0 0.0
      %977 = vmatpush1.msra.mxu0 %v426
      %978 = vmatprep.subr.mxu0 0.0
      %979 = vmatpush2.msra.mxu0 %v457
      %980 = vmatprep.subr.mxu0 0.0
      %981 = vmatpush2.msra.mxu0 %v456
      %982 = vmatprep.subr.mxu0 0.0
      %983 = vmatpush2.msra.mxu0 %v455
      %984 = vmatprep.subr.mxu0 0.0
      %985 = vmatpush2.msra.mxu0 %v454
      %986 = vmatprep.subr.mxu0 0.0
      %987 = vmatpush2.msra.mxu0 %v453
      %988 = vmatprep.subr.mxu0 0.0
      %989 = vmatpush2.msra.mxu0 %v452
      %990 = vmatprep.subr.mxu0 0.0
      %991 = vmatpush2.msra.mxu0 %v451
      %992 = vmatprep.subr.mxu0 0.0
      %993 = vmatpush2.msra.mxu0 %v450
      %994 = vmatprep.subr.mxu0 0.0
      %995 = vmatpush2.msra.mxu0 %v449
      %996 = vmatprep.subr.mxu0 0.0
      %997 = vmatpush2.msra.mxu0 %v448
      %998 = vmatprep.subr.mxu0 0.0
      %999 = vmatpush2.msra.mxu0 %v447
      %1000 = vmatprep.subr.mxu0 0.0
      %1001 = vmatpush2.msra.mxu0 %v446
      %1002 = vmatprep.subr.mxu0 0.0
      %1003 = vmatpush2.msra.mxu0 %v445
      %1004 = vmatprep.subr.mxu0 0.0
      %1005 = vmatpush2.msra.mxu0 %v444
      %1006 = vmatprep.subr.mxu0 0.0
      %1007 = vmatpush2.msra.mxu0 %v443
      %1008 = vmatprep.subr.mxu0 0.0
      %1009 = vmatpush2.msra.mxu0 %v442
      %1010 = vmatprep.mubr.f32.mxu0 %v199
      %1011 = vmatmul.mubr.f32.gmra.mxu0 %v198
      %v1012 = vpop.f32.mrf.mxu0
      %v1013 = vadd.f32 %v913, %v1012
      %v1014 = vpop.f32.mrf.mxu0
      %1015 = vmatprep.mubr.f32.mxu0 %v223
      %1016 = vmatmul.mubr.f32.gmra.mxu0 %v222
      %v1017 = vpop.f32.mrf.mxu0
      %v1018 = vadd.f32 %v918, %v1017
      %v1019 = vpop.f32.mrf.mxu0
      %1020 = vmatprep.mubr.f32.mxu0 %v247
      %1021 = vmatmul.mubr.f32.gmra.mxu0 %v246
      %v1022 = vpop.f32.mrf.mxu0
      %v1023 = vadd.f32 %v923, %v1022
      %v1024 = vpop.f32.mrf.mxu0
      %1025 = vmatprep.mubr.f32.mxu0 %v271
      %1026 = vmatmul.mubr.f32.gmra.mxu0 %v270
      %v1027 = vpop.f32.mrf.mxu0
      %v1028 = vadd.f32 %v928, %v1027
      %v1029 = vpop.f32.mrf.mxu0
      %1030 = vmatprep.mubr.f32.mxu0 %v295
      %1031 = vmatmul.mubr.f32.gmra.mxu0 %v294
      %v1032 = vpop.f32.mrf.mxu0
      %v1033 = vadd.f32 %v933, %v1032
      %v1034 = vpop.f32.mrf.mxu0
      %1035 = vmatprep.mubr.f32.mxu0 %v319
      %1036 = vmatmul.mubr.f32.gmra.mxu0 %v318
      %v1037 = vpop.f32.mrf.mxu0
      %v1038 = vadd.f32 %v938, %v1037
      %v1039 = vpop.f32.mrf.mxu0
      %1040 = vmatprep.mubr.f32.mxu0 %v343
      %1041 = vmatmul.mubr.f32.gmra.mxu0 %v342
      %v1042 = vpop.f32.mrf.mxu0
      %v1043 = vadd.f32 %v943, %v1042
      %v1044 = vpop.f32.mrf.mxu0
      %1045 = vdwg.mxu0
      %1046 = vmatprep.subr.mxu0 0.0
      %1047 = vmatpush1.msra.mxu0 %v473
      %1048 = vmatprep.subr.mxu0 0.0
      %1049 = vmatpush1.msra.mxu0 %v472
      %1050 = vmatprep.subr.mxu0 0.0
      %1051 = vmatpush1.msra.mxu0 %v471
      %1052 = vmatprep.subr.mxu0 0.0
      %1053 = vmatpush1.msra.mxu0 %v470
      %1054 = vmatprep.subr.mxu0 0.0
      %1055 = vmatpush1.msra.mxu0 %v469
      %1056 = vmatprep.subr.mxu0 0.0
      %1057 = vmatpush1.msra.mxu0 %v468
      %1058 = vmatprep.subr.mxu0 0.0
      %1059 = vmatpush1.msra.mxu0 %v467
      %1060 = vmatprep.subr.mxu0 0.0
      %1061 = vmatpush1.msra.mxu0 %v466
      %1062 = vmatprep.subr.mxu0 0.0
      %1063 = vmatpush1.msra.mxu0 %v465
      %1064 = vmatprep.subr.mxu0 0.0
      %1065 = vmatpush1.msra.mxu0 %v464
      %1066 = vmatprep.subr.mxu0 0.0
      %1067 = vmatpush1.msra.mxu0 %v463
      %1068 = vmatprep.subr.mxu0 0.0
      %1069 = vmatpush1.msra.mxu0 %v462
      %1070 = vmatprep.subr.mxu0 0.0
      %1071 = vmatpush1.msra.mxu0 %v461
      %1072 = vmatprep.subr.mxu0 0.0
      %1073 = vmatpush1.msra.mxu0 %v460
      %1074 = vmatprep.subr.mxu0 0.0
      %1075 = vmatpush1.msra.mxu0 %v459
      %1076 = vmatprep.subr.mxu0 0.0
      %1077 = vmatpush1.msra.mxu0 %v458
      %1078 = vmatprep.subr.mxu0 0.0
      %1079 = vmatpush2.msra.mxu0 %v489
      %1080 = vmatprep.subr.mxu0 0.0
      %1081 = vmatpush2.msra.mxu0 %v488
      %1082 = vmatprep.subr.mxu0 0.0
      %1083 = vmatpush2.msra.mxu0 %v487
      %1084 = vmatprep.subr.mxu0 0.0
      %1085 = vmatpush2.msra.mxu0 %v486
      %1086 = vmatprep.subr.mxu0 0.0
      %1087 = vmatpush2.msra.mxu0 %v485
      %1088 = vmatprep.subr.mxu0 0.0
      %1089 = vmatpush2.msra.mxu0 %v484
      %1090 = vmatprep.subr.mxu0 0.0
      %1091 = vmatpush2.msra.mxu0 %v483
      %1092 = vmatprep.subr.mxu0 0.0
      %1093 = vmatpush2.msra.mxu0 %v482
      %1094 = vmatprep.subr.mxu0 0.0
      %1095 = vmatpush2.msra.mxu0 %v481
      %1096 = vmatprep.subr.mxu0 0.0
      %1097 = vmatpush2.msra.mxu0 %v480
      %1098 = vmatprep.subr.mxu0 0.0
      %1099 = vmatpush2.msra.mxu0 %v479
      %1100 = vmatprep.subr.mxu0 0.0
      %1101 = vmatpush2.msra.mxu0 %v478
      %1102 = vmatprep.subr.mxu0 0.0
      %1103 = vmatpush2.msra.mxu0 %v477
      %1104 = vmatprep.subr.mxu0 0.0
      %1105 = vmatpush2.msra.mxu0 %v476
      %1106 = vmatprep.subr.mxu0 0.0
      %1107 = vmatpush2.msra.mxu0 %v475
      %1108 = vmatprep.subr.mxu0 0.0
      %1109 = vmatpush2.msra.mxu0 %v474
      %1110 = vmatprep.mubr.f32.mxu0 %v201
      %1111 = vmatmul.mubr.f32.gmra.mxu0 %v200
      %v1112 = vpop.f32.mrf.mxu0
      %v1113 = vadd.f32 %v1013, %v1112
      %v1114 = vpop.f32.mrf.mxu0
      %1115 = vmatprep.mubr.f32.mxu0 %v225
      %1116 = vmatmul.mubr.f32.gmra.mxu0 %v224
      %v1117 = vpop.f32.mrf.mxu0
      %v1118 = vadd.f32 %v1018, %v1117
      %v1119 = vpop.f32.mrf.mxu0
      %1120 = vmatprep.mubr.f32.mxu0 %v249
      %1121 = vmatmul.mubr.f32.gmra.mxu0 %v248
      %v1122 = vpop.f32.mrf.mxu0
      %v1123 = vadd.f32 %v1023, %v1122
      %v1124 = vpop.f32.mrf.mxu0
      %1125 = vmatprep.mubr.f32.mxu0 %v273
      %1126 = vmatmul.mubr.f32.gmra.mxu0 %v272
      %v1127 = vpop.f32.mrf.mxu0
      %v1128 = vadd.f32 %v1028, %v1127
      %v1129 = vpop.f32.mrf.mxu0
      %1130 = vmatprep.mubr.f32.mxu0 %v297
      %1131 = vmatmul.mubr.f32.gmra.mxu0 %v296
      %v1132 = vpop.f32.mrf.mxu0
      %v1133 = vadd.f32 %v1033, %v1132
      %v1134 = vpop.f32.mrf.mxu0
      %1135 = vmatprep.mubr.f32.mxu0 %v321
      %1136 = vmatmul.mubr.f32.gmra.mxu0 %v320
      %v1137 = vpop.f32.mrf.mxu0
      %v1138 = vadd.f32 %v1038, %v1137
      %v1139 = vpop.f32.mrf.mxu0
      %1140 = vmatprep.mubr.f32.mxu0 %v345
      %1141 = vmatmul.mubr.f32.gmra.mxu0 %v344
      %v1142 = vpop.f32.mrf.mxu0
      %v1143 = vadd.f32 %v1043, %v1142
      %v1144 = vpop.f32.mrf.mxu0
      %1145 = vdwg.mxu0
      %1146 = vmatprep.subr.mxu0 0.0
      %1147 = vmatpush1.msra.mxu0 %v505
      %1148 = vmatprep.subr.mxu0 0.0
      %1149 = vmatpush1.msra.mxu0 %v504
      %1150 = vmatprep.subr.mxu0 0.0
      %1151 = vmatpush1.msra.mxu0 %v503
      %1152 = vmatprep.subr.mxu0 0.0
      %1153 = vmatpush1.msra.mxu0 %v502
      %1154 = vmatprep.subr.mxu0 0.0
      %1155 = vmatpush1.msra.mxu0 %v501
      %1156 = vmatprep.subr.mxu0 0.0
      %1157 = vmatpush1.msra.mxu0 %v500
      %1158 = vmatprep.subr.mxu0 0.0
      %1159 = vmatpush1.msra.mxu0 %v499
      %1160 = vmatprep.subr.mxu0 0.0
      %1161 = vmatpush1.msra.mxu0 %v498
      %1162 = vmatprep.subr.mxu0 0.0
      %1163 = vmatpush1.msra.mxu0 %v497
      %1164 = vmatprep.subr.mxu0 0.0
      %1165 = vmatpush1.msra.mxu0 %v496
      %1166 = vmatprep.subr.mxu0 0.0
      %1167 = vmatpush1.msra.mxu0 %v495
      %1168 = vmatprep.subr.mxu0 0.0
      %1169 = vmatpush1.msra.mxu0 %v494
      %1170 = vmatprep.subr.mxu0 0.0
      %1171 = vmatpush1.msra.mxu0 %v493
      %1172 = vmatprep.subr.mxu0 0.0
      %1173 = vmatpush1.msra.mxu0 %v492
      %1174 = vmatprep.subr.mxu0 0.0
      %1175 = vmatpush1.msra.mxu0 %v491
      %1176 = vmatprep.subr.mxu0 0.0
      %1177 = vmatpush1.msra.mxu0 %v490
      %1178 = vmatprep.subr.mxu0 0.0
      %1179 = vmatpush2.msra.mxu0 %v521
      %1180 = vmatprep.subr.mxu0 0.0
      %1181 = vmatpush2.msra.mxu0 %v520
      %1182 = vmatprep.subr.mxu0 0.0
      %1183 = vmatpush2.msra.mxu0 %v519
      %1184 = vmatprep.subr.mxu0 0.0
      %1185 = vmatpush2.msra.mxu0 %v518
      %1186 = vmatprep.subr.mxu0 0.0
      %1187 = vmatpush2.msra.mxu0 %v517
      %1188 = vmatprep.subr.mxu0 0.0
      %1189 = vmatpush2.msra.mxu0 %v516
      %1190 = vmatprep.subr.mxu0 0.0
      %1191 = vmatpush2.msra.mxu0 %v515
      %1192 = vmatprep.subr.mxu0 0.0
      %1193 = vmatpush2.msra.mxu0 %v514
      %1194 = vmatprep.subr.mxu0 0.0
      %1195 = vmatpush2.msra.mxu0 %v513
      %1196 = vmatprep.subr.mxu0 0.0
      %1197 = vmatpush2.msra.mxu0 %v512
      %1198 = vmatprep.subr.mxu0 0.0
      %1199 = vmatpush2.msra.mxu0 %v511
      %1200 = vmatprep.subr.mxu0 0.0
      %1201 = vmatpush2.msra.mxu0 %v510
      %1202 = vmatprep.subr.mxu0 0.0
      %1203 = vmatpush2.msra.mxu0 %v509
      %1204 = vmatprep.subr.mxu0 0.0
      %1205 = vmatpush2.msra.mxu0 %v508
      %1206 = vmatprep.subr.mxu0 0.0
      %1207 = vmatpush2.msra.mxu0 %v507
      %1208 = vmatprep.subr.mxu0 0.0
      %1209 = vmatpush2.msra.mxu0 %v506
      %1210 = vmatprep.mubr.f32.mxu0 %v203
      %1211 = vmatmul.mubr.f32.gmra.mxu0 %v202
      %v1212 = vpop.f32.mrf.mxu0
      %v1213 = vadd.f32 %v1113, %v1212
      %v1214 = vpop.f32.mrf.mxu0
      %1215 = vmatprep.mubr.f32.mxu0 %v227
      %1216 = vmatmul.mubr.f32.gmra.mxu0 %v226
      %v1217 = vpop.f32.mrf.mxu0
      %v1218 = vadd.f32 %v1118, %v1217
      %v1219 = vpop.f32.mrf.mxu0
      %1220 = vmatprep.mubr.f32.mxu0 %v251
      %1221 = vmatmul.mubr.f32.gmra.mxu0 %v250
      %v1222 = vpop.f32.mrf.mxu0
      %v1223 = vadd.f32 %v1123, %v1222
      %v1224 = vpop.f32.mrf.mxu0
      %1225 = vmatprep.mubr.f32.mxu0 %v275
      %1226 = vmatmul.mubr.f32.gmra.mxu0 %v274
      %v1227 = vpop.f32.mrf.mxu0
      %v1228 = vadd.f32 %v1128, %v1227
      %v1229 = vpop.f32.mrf.mxu0
      %1230 = vmatprep.mubr.f32.mxu0 %v299
      %1231 = vmatmul.mubr.f32.gmra.mxu0 %v298
      %v1232 = vpop.f32.mrf.mxu0
      %v1233 = vadd.f32 %v1133, %v1232
      %v1234 = vpop.f32.mrf.mxu0
      %1235 = vmatprep.mubr.f32.mxu0 %v323
      %1236 = vmatmul.mubr.f32.gmra.mxu0 %v322
      %v1237 = vpop.f32.mrf.mxu0
      %v1238 = vadd.f32 %v1138, %v1237
      %v1239 = vpop.f32.mrf.mxu0
      %1240 = vmatprep.mubr.f32.mxu0 %v347
      %1241 = vmatmul.mubr.f32.gmra.mxu0 %v346
      %v1242 = vpop.f32.mrf.mxu0
      %v1243 = vadd.f32 %v1143, %v1242
      %v1244 = vpop.f32.mrf.mxu0
      %1245 = vdwg.mxu0
      %1246 = vmatprep.subr.mxu0 0.0
      %1247 = vmatpush1.msra.mxu0 %v537
      %1248 = vmatprep.subr.mxu0 0.0
      %1249 = vmatpush1.msra.mxu0 %v536
      %1250 = vmatprep.subr.mxu0 0.0
      %1251 = vmatpush1.msra.mxu0 %v535
      %1252 = vmatprep.subr.mxu0 0.0
      %1253 = vmatpush1.msra.mxu0 %v534
      %1254 = vmatprep.subr.mxu0 0.0
      %1255 = vmatpush1.msra.mxu0 %v533
      %1256 = vmatprep.subr.mxu0 0.0
      %1257 = vmatpush1.msra.mxu0 %v532
      %1258 = vmatprep.subr.mxu0 0.0
      %1259 = vmatpush1.msra.mxu0 %v531
      %1260 = vmatprep.subr.mxu0 0.0
      %1261 = vmatpush1.msra.mxu0 %v530
      %1262 = vmatprep.subr.mxu0 0.0
      %1263 = vmatpush1.msra.mxu0 %v529
      %1264 = vmatprep.subr.mxu0 0.0
      %1265 = vmatpush1.msra.mxu0 %v528
      %1266 = vmatprep.subr.mxu0 0.0
      %1267 = vmatpush1.msra.mxu0 %v527
      %1268 = vmatprep.subr.mxu0 0.0
      %1269 = vmatpush1.msra.mxu0 %v526
      %1270 = vmatprep.subr.mxu0 0.0
      %1271 = vmatpush1.msra.mxu0 %v525
      %1272 = vmatprep.subr.mxu0 0.0
      %1273 = vmatpush1.msra.mxu0 %v524
      %1274 = vmatprep.subr.mxu0 0.0
      %1275 = vmatpush1.msra.mxu0 %v523
      %1276 = vmatprep.subr.mxu0 0.0
      %1277 = vmatpush1.msra.mxu0 %v522
      %1278 = vmatprep.subr.mxu0 0.0
      %1279 = vmatpush2.msra.mxu0 %v553
      %1280 = vmatprep.subr.mxu0 0.0
      %1281 = vmatpush2.msra.mxu0 %v552
      %1282 = vmatprep.subr.mxu0 0.0
      %1283 = vmatpush2.msra.mxu0 %v551
      %1284 = vmatprep.subr.mxu0 0.0
      %1285 = vmatpush2.msra.mxu0 %v550
      %1286 = vmatprep.subr.mxu0 0.0
      %1287 = vmatpush2.msra.mxu0 %v549
      %1288 = vmatprep.subr.mxu0 0.0
      %1289 = vmatpush2.msra.mxu0 %v548
      %1290 = vmatprep.subr.mxu0 0.0
      %1291 = vmatpush2.msra.mxu0 %v547
      %1292 = vmatprep.subr.mxu0 0.0
      %1293 = vmatpush2.msra.mxu0 %v546
      %1294 = vmatprep.subr.mxu0 0.0
      %1295 = vmatpush2.msra.mxu0 %v545
      %1296 = vmatprep.subr.mxu0 0.0
      %1297 = vmatpush2.msra.mxu0 %v544
      %1298 = vmatprep.subr.mxu0 0.0
      %1299 = vmatpush2.msra.mxu0 %v543
      %1300 = vmatprep.subr.mxu0 0.0
      %1301 = vmatpush2.msra.mxu0 %v542
      %1302 = vmatprep.subr.mxu0 0.0
      %1303 = vmatpush2.msra.mxu0 %v541
      %1304 = vmatprep.subr.mxu0 0.0
      %1305 = vmatpush2.msra.mxu0 %v540
      %1306 = vmatprep.subr.mxu0 0.0
      %1307 = vmatpush2.msra.mxu0 %v539
      %1308 = vmatprep.subr.mxu0 0.0
      %1309 = vmatpush2.msra.mxu0 %v538
      %1310 = vmatprep.mubr.f32.mxu0 %v205
      %1311 = vmatmul.mubr.f32.gmra.mxu0 %v204
      %v1312 = vpop.f32.mrf.mxu0
      %v1313 = vadd.f32 %v1213, %v1312
      %v1314 = vpop.f32.mrf.mxu0
      %1315 = vmatprep.mubr.f32.mxu0 %v229
      %1316 = vmatmul.mubr.f32.gmra.mxu0 %v228
      %v1317 = vpop.f32.mrf.mxu0
      %v1318 = vadd.f32 %v1218, %v1317
      %v1319 = vpop.f32.mrf.mxu0
      %1320 = vmatprep.mubr.f32.mxu0 %v253
      %1321 = vmatmul.mubr.f32.gmra.mxu0 %v252
      %v1322 = vpop.f32.mrf.mxu0
      %v1323 = vadd.f32 %v1223, %v1322
      %v1324 = vpop.f32.mrf.mxu0
      %1325 = vmatprep.mubr.f32.mxu0 %v277
      %1326 = vmatmul.mubr.f32.gmra.mxu0 %v276
      %v1327 = vpop.f32.mrf.mxu0
      %v1328 = vadd.f32 %v1228, %v1327
      %v1329 = vpop.f32.mrf.mxu0
      %1330 = vmatprep.mubr.f32.mxu0 %v301
      %1331 = vmatmul.mubr.f32.gmra.mxu0 %v300
      %v1332 = vpop.f32.mrf.mxu0
      %v1333 = vadd.f32 %v1233, %v1332
      %v1334 = vpop.f32.mrf.mxu0
      %1335 = vmatprep.mubr.f32.mxu0 %v325
      %1336 = vmatmul.mubr.f32.gmra.mxu0 %v324
      %v1337 = vpop.f32.mrf.mxu0
      %v1338 = vadd.f32 %v1238, %v1337
      %v1339 = vpop.f32.mrf.mxu0
      %1340 = vmatprep.mubr.f32.mxu0 %v349
      %1341 = vmatmul.mubr.f32.gmra.mxu0 %v348
      %v1342 = vpop.f32.mrf.mxu0
      %v1343 = vadd.f32 %v1243, %v1342
      %v1344 = vpop.f32.mrf.mxu0
      %1345 = vdwg.mxu0
      %1346 = vmatprep.subr.mxu0 0.0
      %1347 = vmatpush1.msra.mxu0 %v569
      %1348 = vmatprep.subr.mxu0 0.0
      %1349 = vmatpush1.msra.mxu0 %v568
      %1350 = vmatprep.subr.mxu0 0.0
      %1351 = vmatpush1.msra.mxu0 %v567
      %1352 = vmatprep.subr.mxu0 0.0
      %1353 = vmatpush1.msra.mxu0 %v566
      %1354 = vmatprep.subr.mxu0 0.0
      %1355 = vmatpush1.msra.mxu0 %v565
      %1356 = vmatprep.subr.mxu0 0.0
      %1357 = vmatpush1.msra.mxu0 %v564
      %1358 = vmatprep.subr.mxu0 0.0
      %1359 = vmatpush1.msra.mxu0 %v563
      %1360 = vmatprep.subr.mxu0 0.0
      %1361 = vmatpush1.msra.mxu0 %v562
      %1362 = vmatprep.subr.mxu0 0.0
      %1363 = vmatpush1.msra.mxu0 %v561
      %1364 = vmatprep.subr.mxu0 0.0
      %1365 = vmatpush1.msra.mxu0 %v560
      %1366 = vmatprep.subr.mxu0 0.0
      %1367 = vmatpush1.msra.mxu0 %v559
      %1368 = vmatprep.subr.mxu0 0.0
      %1369 = vmatpush1.msra.mxu0 %v558
      %1370 = vmatprep.subr.mxu0 0.0
      %1371 = vmatpush1.msra.mxu0 %v557
      %1372 = vmatprep.subr.mxu0 0.0
      %1373 = vmatpush1.msra.mxu0 %v556
      %1374 = vmatprep.subr.mxu0 0.0
      %1375 = vmatpush1.msra.mxu0 %v555
      %1376 = vmatprep.subr.mxu0 0.0
      %1377 = vmatpush1.msra.mxu0 %v554
      %1378 = vmatprep.subr.mxu0 0.0
      %1379 = vmatpush2.msra.mxu0 %v585
      %1380 = vmatprep.subr.mxu0 0.0
      %1381 = vmatpush2.msra.mxu0 %v584
      %1382 = vmatprep.subr.mxu0 0.0
      %1383 = vmatpush2.msra.mxu0 %v583
      %1384 = vmatprep.subr.mxu0 0.0
      %1385 = vmatpush2.msra.mxu0 %v582
      %1386 = vmatprep.subr.mxu0 0.0
      %1387 = vmatpush2.msra.mxu0 %v581
      %1388 = vmatprep.subr.mxu0 0.0
      %1389 = vmatpush2.msra.mxu0 %v580
      %1390 = vmatprep.subr.mxu0 0.0
      %1391 = vmatpush2.msra.mxu0 %v579
      %1392 = vmatprep.subr.mxu0 0.0
      %1393 = vmatpush2.msra.mxu0 %v578
      %1394 = vmatprep.subr.mxu0 0.0
      %1395 = vmatpush2.msra.mxu0 %v577
      %1396 = vmatprep.subr.mxu0 0.0
      %1397 = vmatpush2.msra.mxu0 %v576
      %1398 = vmatprep.subr.mxu0 0.0
      %1399 = vmatpush2.msra.mxu0 %v575
      %1400 = vmatprep.subr.mxu0 0.0
      %1401 = vmatpush2.msra.mxu0 %v574
      %1402 = vmatprep.subr.mxu0 0.0
      %1403 = vmatpush2.msra.mxu0 %v573
      %1404 = vmatprep.subr.mxu0 0.0
      %1405 = vmatpush2.msra.mxu0 %v572
      %1406 = vmatprep.subr.mxu0 0.0
      %1407 = vmatpush2.msra.mxu0 %v571
      %1408 = vmatprep.subr.mxu0 0.0
      %1409 = vmatpush2.msra.mxu0 %v570
      %1410 = vmatprep.mubr.f32.mxu0 %v207
      %1411 = vmatmul.mubr.f32.gmra.mxu0 %v206
      %v1412 = vpop.f32.mrf.mxu0
      %v1413 = vadd.f32 %v1313, %v1412
      %v1414 = vpop.f32.mrf.mxu0
      %1415 = vmatprep.mubr.f32.mxu0 %v231
      %1416 = vmatmul.mubr.f32.gmra.mxu0 %v230
      %v1417 = vpop.f32.mrf.mxu0
      %v1418 = vadd.f32 %v1318, %v1417
      %v1419 = vpop.f32.mrf.mxu0
      %1420 = vmatprep.mubr.f32.mxu0 %v255
      %1421 = vmatmul.mubr.f32.gmra.mxu0 %v254
      %v1422 = vpop.f32.mrf.mxu0
      %v1423 = vadd.f32 %v1323, %v1422
      %v1424 = vpop.f32.mrf.mxu0
      %1425 = vmatprep.mubr.f32.mxu0 %v279
      %1426 = vmatmul.mubr.f32.gmra.mxu0 %v278
      %v1427 = vpop.f32.mrf.mxu0
      %v1428 = vadd.f32 %v1328, %v1427
      %v1429 = vpop.f32.mrf.mxu0
      %1430 = vmatprep.mubr.f32.mxu0 %v303
      %1431 = vmatmul.mubr.f32.gmra.mxu0 %v302
      %v1432 = vpop.f32.mrf.mxu0
      %v1433 = vadd.f32 %v1333, %v1432
      %v1434 = vpop.f32.mrf.mxu0
      %1435 = vmatprep.mubr.f32.mxu0 %v327
      %1436 = vmatmul.mubr.f32.gmra.mxu0 %v326
      %v1437 = vpop.f32.mrf.mxu0
      %v1438 = vadd.f32 %v1338, %v1437
      %v1439 = vpop.f32.mrf.mxu0
      %1440 = vmatprep.mubr.f32.mxu0 %v351
      %1441 = vmatmul.mubr.f32.gmra.mxu0 %v350
      %v1442 = vpop.f32.mrf.mxu0
      %v1443 = vadd.f32 %v1343, %v1442
      %v1444 = vpop.f32.mrf.mxu0
      %1445 = vdwg.mxu0
      %1446 = vmatprep.subr.mxu0 0.0
      %1447 = vmatpush1.msra.mxu0 %v601
      %1448 = vmatprep.subr.mxu0 0.0
      %1449 = vmatpush1.msra.mxu0 %v600
      %1450 = vmatprep.subr.mxu0 0.0
      %1451 = vmatpush1.msra.mxu0 %v599
      %1452 = vmatprep.subr.mxu0 0.0
      %1453 = vmatpush1.msra.mxu0 %v598
      %1454 = vmatprep.subr.mxu0 0.0
      %1455 = vmatpush1.msra.mxu0 %v597
      %1456 = vmatprep.subr.mxu0 0.0
      %1457 = vmatpush1.msra.mxu0 %v596
      %1458 = vmatprep.subr.mxu0 0.0
      %1459 = vmatpush1.msra.mxu0 %v595
      %1460 = vmatprep.subr.mxu0 0.0
      %1461 = vmatpush1.msra.mxu0 %v594
      %1462 = vmatprep.subr.mxu0 0.0
      %1463 = vmatpush1.msra.mxu0 %v593
      %1464 = vmatprep.subr.mxu0 0.0
      %1465 = vmatpush1.msra.mxu0 %v592
      %1466 = vmatprep.subr.mxu0 0.0
      %1467 = vmatpush1.msra.mxu0 %v591
      %1468 = vmatprep.subr.mxu0 0.0
      %1469 = vmatpush1.msra.mxu0 %v590
      %1470 = vmatprep.subr.mxu0 0.0
      %1471 = vmatpush1.msra.mxu0 %v589
      %1472 = vmatprep.subr.mxu0 0.0
      %1473 = vmatpush1.msra.mxu0 %v588
      %1474 = vmatprep.subr.mxu0 0.0
      %1475 = vmatpush1.msra.mxu0 %v587
      %1476 = vmatprep.subr.mxu0 0.0
      %1477 = vmatpush1.msra.mxu0 %v586
      %1478 = vmatprep.subr.mxu0 0.0
      %1479 = vmatpush2.msra.mxu0 %v617
      %1480 = vmatprep.subr.mxu0 0.0
      %1481 = vmatpush2.msra.mxu0 %v616
      %1482 = vmatprep.subr.mxu0 0.0
      %1483 = vmatpush2.msra.mxu0 %v615
      %1484 = vmatprep.subr.mxu0 0.0
      %1485 = vmatpush2.msra.mxu0 %v614
      %1486 = vmatprep.subr.mxu0 0.0
      %1487 = vmatpush2.msra.mxu0 %v613
      %1488 = vmatprep.subr.mxu0 0.0
      %1489 = vmatpush2.msra.mxu0 %v612
      %1490 = vmatprep.subr.mxu0 0.0
      %1491 = vmatpush2.msra.mxu0 %v611
      %1492 = vmatprep.subr.mxu0 0.0
      %1493 = vmatpush2.msra.mxu0 %v610
      %1494 = vmatprep.subr.mxu0 0.0
      %1495 = vmatpush2.msra.mxu0 %v609
      %1496 = vmatprep.subr.mxu0 0.0
      %1497 = vmatpush2.msra.mxu0 %v608
      %1498 = vmatprep.subr.mxu0 0.0
      %1499 = vmatpush2.msra.mxu0 %v607
      %1500 = vmatprep.subr.mxu0 0.0
      %1501 = vmatpush2.msra.mxu0 %v606
      %1502 = vmatprep.subr.mxu0 0.0
      %1503 = vmatpush2.msra.mxu0 %v605
      %1504 = vmatprep.subr.mxu0 0.0
      %1505 = vmatpush2.msra.mxu0 %v604
      %1506 = vmatprep.subr.mxu0 0.0
      %1507 = vmatpush2.msra.mxu0 %v603
      %1508 = vmatprep.subr.mxu0 0.0
      %1509 = vmatpush2.msra.mxu0 %v602
      %1510 = vmatprep.mubr.f32.mxu0 %v209
      %1511 = vmatmul.mubr.f32.gmra.mxu0 %v208
      %v1512 = vpop.f32.mrf.mxu0
      %v1513 = vadd.f32 %v1413, %v1512
      %v1514 = vpop.f32.mrf.mxu0
      %1515 = vmatprep.mubr.f32.mxu0 %v233
      %1516 = vmatmul.mubr.f32.gmra.mxu0 %v232
      %v1517 = vpop.f32.mrf.mxu0
      %v1518 = vadd.f32 %v1418, %v1517
      %v1519 = vpop.f32.mrf.mxu0
      %1520 = vmatprep.mubr.f32.mxu0 %v257
      %1521 = vmatmul.mubr.f32.gmra.mxu0 %v256
      %v1522 = vpop.f32.mrf.mxu0
      %v1523 = vadd.f32 %v1423, %v1522
      %v1524 = vpop.f32.mrf.mxu0
      %1525 = vmatprep.mubr.f32.mxu0 %v281
      %1526 = vmatmul.mubr.f32.gmra.mxu0 %v280
      %v1527 = vpop.f32.mrf.mxu0
      %v1528 = vadd.f32 %v1428, %v1527
      %v1529 = vpop.f32.mrf.mxu0
      %1530 = vmatprep.mubr.f32.mxu0 %v305
      %1531 = vmatmul.mubr.f32.gmra.mxu0 %v304
      %v1532 = vpop.f32.mrf.mxu0
      %v1533 = vadd.f32 %v1433, %v1532
      %v1534 = vpop.f32.mrf.mxu0
      %1535 = vmatprep.mubr.f32.mxu0 %v329
      %1536 = vmatmul.mubr.f32.gmra.mxu0 %v328
      %v1537 = vpop.f32.mrf.mxu0
      %v1538 = vadd.f32 %v1438, %v1537
      %v1539 = vpop.f32.mrf.mxu0
      %1540 = vmatprep.mubr.f32.mxu0 %v353
      %1541 = vmatmul.mubr.f32.gmra.mxu0 %v352
      %v1542 = vpop.f32.mrf.mxu0
      %v1543 = vadd.f32 %v1443, %v1542
      %v1544 = vpop.f32.mrf.mxu0
      %1545 = vdwg.mxu0
      %1546 = vmatprep.subr.mxu0 0.0
      %1547 = vmatpush1.msra.mxu0 %v633
      %1548 = vmatprep.subr.mxu0 0.0
      %1549 = vmatpush1.msra.mxu0 %v632
      %1550 = vmatprep.subr.mxu0 0.0
      %1551 = vmatpush1.msra.mxu0 %v631
      %1552 = vmatprep.subr.mxu0 0.0
      %1553 = vmatpush1.msra.mxu0 %v630
      %1554 = vmatprep.subr.mxu0 0.0
      %1555 = vmatpush1.msra.mxu0 %v629
      %1556 = vmatprep.subr.mxu0 0.0
      %1557 = vmatpush1.msra.mxu0 %v628
      %1558 = vmatprep.subr.mxu0 0.0
      %1559 = vmatpush1.msra.mxu0 %v627
      %1560 = vmatprep.subr.mxu0 0.0
      %1561 = vmatpush1.msra.mxu0 %v626
      %1562 = vmatprep.subr.mxu0 0.0
      %1563 = vmatpush1.msra.mxu0 %v625
      %1564 = vmatprep.subr.mxu0 0.0
      %1565 = vmatpush1.msra.mxu0 %v624
      %1566 = vmatprep.subr.mxu0 0.0
      %1567 = vmatpush1.msra.mxu0 %v623
      %1568 = vmatprep.subr.mxu0 0.0
      %1569 = vmatpush1.msra.mxu0 %v622
      %1570 = vmatprep.subr.mxu0 0.0
      %1571 = vmatpush1.msra.mxu0 %v621
      %1572 = vmatprep.subr.mxu0 0.0
      %1573 = vmatpush1.msra.mxu0 %v620
      %1574 = vmatprep.subr.mxu0 0.0
      %1575 = vmatpush1.msra.mxu0 %v619
      %1576 = vmatprep.subr.mxu0 0.0
      %1577 = vmatpush1.msra.mxu0 %v618
      %1578 = vmatprep.subr.mxu0 0.0
      %1579 = vmatpush2.msra.mxu0 %v649
      %1580 = vmatprep.subr.mxu0 0.0
      %1581 = vmatpush2.msra.mxu0 %v648
      %1582 = vmatprep.subr.mxu0 0.0
      %1583 = vmatpush2.msra.mxu0 %v647
      %1584 = vmatprep.subr.mxu0 0.0
      %1585 = vmatpush2.msra.mxu0 %v646
      %1586 = vmatprep.subr.mxu0 0.0
      %1587 = vmatpush2.msra.mxu0 %v645
      %1588 = vmatprep.subr.mxu0 0.0
      %1589 = vmatpush2.msra.mxu0 %v644
      %1590 = vmatprep.subr.mxu0 0.0
      %1591 = vmatpush2.msra.mxu0 %v643
      %1592 = vmatprep.subr.mxu0 0.0
      %1593 = vmatpush2.msra.mxu0 %v642
      %1594 = vmatprep.subr.mxu0 0.0
      %1595 = vmatpush2.msra.mxu0 %v641
      %1596 = vmatprep.subr.mxu0 0.0
      %1597 = vmatpush2.msra.mxu0 %v640
      %1598 = vmatprep.subr.mxu0 0.0
      %1599 = vmatpush2.msra.mxu0 %v639
      %1600 = vmatprep.subr.mxu0 0.0
      %1601 = vmatpush2.msra.mxu0 %v638
      %1602 = vmatprep.subr.mxu0 0.0
      %1603 = vmatpush2.msra.mxu0 %v637
      %1604 = vmatprep.subr.mxu0 0.0
      %1605 = vmatpush2.msra.mxu0 %v636
      %1606 = vmatprep.subr.mxu0 0.0
      %1607 = vmatpush2.msra.mxu0 %v635
      %1608 = vmatprep.subr.mxu0 0.0
      %1609 = vmatpush2.msra.mxu0 %v634
      %1610 = vmatprep.mubr.f32.mxu0 %v211
      %1611 = vmatmul.mubr.f32.gmra.mxu0 %v210
      %v1612 = vpop.f32.mrf.mxu0
      %v1613 = vadd.f32 %v1513, %v1612
      %v1614 = vpop.f32.mrf.mxu0
      %1615 = vmatprep.mubr.f32.mxu0 %v235
      %1616 = vmatmul.mubr.f32.gmra.mxu0 %v234
      %v1617 = vpop.f32.mrf.mxu0
      %v1618 = vadd.f32 %v1518, %v1617
      %v1619 = vpop.f32.mrf.mxu0
      %1620 = vmatprep.mubr.f32.mxu0 %v259
      %1621 = vmatmul.mubr.f32.gmra.mxu0 %v258
      %v1622 = vpop.f32.mrf.mxu0
      %v1623 = vadd.f32 %v1523, %v1622
      %v1624 = vpop.f32.mrf.mxu0
      %1625 = vmatprep.mubr.f32.mxu0 %v283
      %1626 = vmatmul.mubr.f32.gmra.mxu0 %v282
      %v1627 = vpop.f32.mrf.mxu0
      %v1628 = vadd.f32 %v1528, %v1627
      %v1629 = vpop.f32.mrf.mxu0
      %1630 = vmatprep.mubr.f32.mxu0 %v307
      %1631 = vmatmul.mubr.f32.gmra.mxu0 %v306
      %v1632 = vpop.f32.mrf.mxu0
      %v1633 = vadd.f32 %v1533, %v1632
      %v1634 = vpop.f32.mrf.mxu0
      %1635 = vmatprep.mubr.f32.mxu0 %v331
      %1636 = vmatmul.mubr.f32.gmra.mxu0 %v330
      %v1637 = vpop.f32.mrf.mxu0
      %v1638 = vadd.f32 %v1538, %v1637
      %v1639 = vpop.f32.mrf.mxu0
      %1640 = vmatprep.mubr.f32.mxu0 %v355
      %1641 = vmatmul.mubr.f32.gmra.mxu0 %v354
      %v1642 = vpop.f32.mrf.mxu0
      %v1643 = vadd.f32 %v1543, %v1642
      %v1644 = vpop.f32.mrf.mxu0
      %1645 = vdwg.mxu0
      %1646 = vmatprep.subr.mxu0 0.0
      %1647 = vmatpush1.msra.mxu0 %v665
      %1648 = vmatprep.subr.mxu0 0.0
      %1649 = vmatpush1.msra.mxu0 %v664
      %1650 = vmatprep.subr.mxu0 0.0
      %1651 = vmatpush1.msra.mxu0 %v663
      %1652 = vmatprep.subr.mxu0 0.0
      %1653 = vmatpush1.msra.mxu0 %v662
      %1654 = vmatprep.subr.mxu0 0.0
      %1655 = vmatpush1.msra.mxu0 %v661
      %1656 = vmatprep.subr.mxu0 0.0
      %1657 = vmatpush1.msra.mxu0 %v660
      %1658 = vmatprep.subr.mxu0 0.0
      %1659 = vmatpush1.msra.mxu0 %v659
      %1660 = vmatprep.subr.mxu0 0.0
      %1661 = vmatpush1.msra.mxu0 %v658
      %1662 = vmatprep.subr.mxu0 0.0
      %1663 = vmatpush1.msra.mxu0 %v657
      %1664 = vmatprep.subr.mxu0 0.0
      %1665 = vmatpush1.msra.mxu0 %v656
      %1666 = vmatprep.subr.mxu0 0.0
      %1667 = vmatpush1.msra.mxu0 %v655
      %1668 = vmatprep.subr.mxu0 0.0
      %1669 = vmatpush1.msra.mxu0 %v654
      %1670 = vmatprep.subr.mxu0 0.0
      %1671 = vmatpush1.msra.mxu0 %v653
      %1672 = vmatprep.subr.mxu0 0.0
      %1673 = vmatpush1.msra.mxu0 %v652
      %1674 = vmatprep.subr.mxu0 0.0
      %1675 = vmatpush1.msra.mxu0 %v651
      %1676 = vmatprep.subr.mxu0 0.0
      %1677 = vmatpush1.msra.mxu0 %v650
      %1678 = vmatprep.subr.mxu0 0.0
      %1679 = vmatpush2.msra.mxu0 %v681
      %1680 = vmatprep.subr.mxu0 0.0
      %1681 = vmatpush2.msra.mxu0 %v680
      %1682 = vmatprep.subr.mxu0 0.0
      %1683 = vmatpush2.msra.mxu0 %v679
      %1684 = vmatprep.subr.mxu0 0.0
      %1685 = vmatpush2.msra.mxu0 %v678
      %1686 = vmatprep.subr.mxu0 0.0
      %1687 = vmatpush2.msra.mxu0 %v677
      %1688 = vmatprep.subr.mxu0 0.0
      %1689 = vmatpush2.msra.mxu0 %v676
      %1690 = vmatprep.subr.mxu0 0.0
      %1691 = vmatpush2.msra.mxu0 %v675
      %1692 = vmatprep.subr.mxu0 0.0
      %1693 = vmatpush2.msra.mxu0 %v674
      %1694 = vmatprep.subr.mxu0 0.0
      %1695 = vmatpush2.msra.mxu0 %v673
      %1696 = vmatprep.subr.mxu0 0.0
      %1697 = vmatpush2.msra.mxu0 %v672
      %1698 = vmatprep.subr.mxu0 0.0
      %1699 = vmatpush2.msra.mxu0 %v671
      %1700 = vmatprep.subr.mxu0 0.0
      %1701 = vmatpush2.msra.mxu0 %v670
      %1702 = vmatprep.subr.mxu0 0.0
      %1703 = vmatpush2.msra.mxu0 %v669
      %1704 = vmatprep.subr.mxu0 0.0
      %1705 = vmatpush2.msra.mxu0 %v668
      %1706 = vmatprep.subr.mxu0 0.0
      %1707 = vmatpush2.msra.mxu0 %v667
      %1708 = vmatprep.subr.mxu0 0.0
      %1709 = vmatpush2.msra.mxu0 %v666
      %1710 = vmatprep.mubr.f32.mxu0 %v213
      %1711 = vmatmul.mubr.f32.gmra.mxu0 %v212
      %v1712 = vpop.f32.mrf.mxu0
      %v1713 = vadd.f32 %v1613, %v1712
      %v1714 = vpop.f32.mrf.mxu0
      %1715 = vmatprep.mubr.f32.mxu0 %v237
      %1716 = vmatmul.mubr.f32.gmra.mxu0 %v236
      %v1717 = vpop.f32.mrf.mxu0
      %v1718 = vadd.f32 %v1618, %v1717
      %v1719 = vpop.f32.mrf.mxu0
      %1720 = vmatprep.mubr.f32.mxu0 %v261
      %1721 = vmatmul.mubr.f32.gmra.mxu0 %v260
      %v1722 = vpop.f32.mrf.mxu0
      %v1723 = vadd.f32 %v1623, %v1722
      %v1724 = vpop.f32.mrf.mxu0
      %1725 = vmatprep.mubr.f32.mxu0 %v285
      %1726 = vmatmul.mubr.f32.gmra.mxu0 %v284
      %v1727 = vpop.f32.mrf.mxu0
      %v1728 = vadd.f32 %v1628, %v1727
      %v1729 = vpop.f32.mrf.mxu0
      %1730 = vmatprep.mubr.f32.mxu0 %v309
      %1731 = vmatmul.mubr.f32.gmra.mxu0 %v308
      %v1732 = vpop.f32.mrf.mxu0
      %v1733 = vadd.f32 %v1633, %v1732
      %v1734 = vpop.f32.mrf.mxu0
      %1735 = vmatprep.mubr.f32.mxu0 %v333
      %1736 = vmatmul.mubr.f32.gmra.mxu0 %v332
      %v1737 = vpop.f32.mrf.mxu0
      %v1738 = vadd.f32 %v1638, %v1737
      %v1739 = vpop.f32.mrf.mxu0
      %1740 = vmatprep.mubr.f32.mxu0 %v357
      %1741 = vmatmul.mubr.f32.gmra.mxu0 %v356
      %v1742 = vpop.f32.mrf.mxu0
      %v1743 = vadd.f32 %v1643, %v1742
      %v1744 = vpop.f32.mrf.mxu0
      %1745 = vdwg.mxu0
      %1746 = vmatprep.subr.mxu0 0.0
      %1747 = vmatpush1.msra.mxu0 %v697
      %1748 = vmatprep.subr.mxu0 0.0
      %1749 = vmatpush1.msra.mxu0 %v696
      %1750 = vmatprep.subr.mxu0 0.0
      %1751 = vmatpush1.msra.mxu0 %v695
      %1752 = vmatprep.subr.mxu0 0.0
      %1753 = vmatpush1.msra.mxu0 %v694
      %1754 = vmatprep.subr.mxu0 0.0
      %1755 = vmatpush1.msra.mxu0 %v693
      %1756 = vmatprep.subr.mxu0 0.0
      %1757 = vmatpush1.msra.mxu0 %v692
      %1758 = vmatprep.subr.mxu0 0.0
      %1759 = vmatpush1.msra.mxu0 %v691
      %1760 = vmatprep.subr.mxu0 0.0
      %1761 = vmatpush1.msra.mxu0 %v690
      %1762 = vmatprep.subr.mxu0 0.0
      %1763 = vmatpush1.msra.mxu0 %v689
      %1764 = vmatprep.subr.mxu0 0.0
      %1765 = vmatpush1.msra.mxu0 %v688
      %1766 = vmatprep.subr.mxu0 0.0
      %1767 = vmatpush1.msra.mxu0 %v687
      %1768 = vmatprep.subr.mxu0 0.0
      %1769 = vmatpush1.msra.mxu0 %v686
      %1770 = vmatprep.subr.mxu0 0.0
      %1771 = vmatpush1.msra.mxu0 %v685
      %1772 = vmatprep.subr.mxu0 0.0
      %1773 = vmatpush1.msra.mxu0 %v684
      %1774 = vmatprep.subr.mxu0 0.0
      %1775 = vmatpush1.msra.mxu0 %v683
      %1776 = vmatprep.subr.mxu0 0.0
      %1777 = vmatpush1.msra.mxu0 %v682
      %1778 = vmatprep.subr.mxu0 0.0
      %1779 = vmatpush2.msra.mxu0 %v713
      %1780 = vmatprep.subr.mxu0 0.0
      %1781 = vmatpush2.msra.mxu0 %v712
      %1782 = vmatprep.subr.mxu0 0.0
      %1783 = vmatpush2.msra.mxu0 %v711
      %1784 = vmatprep.subr.mxu0 0.0
      %1785 = vmatpush2.msra.mxu0 %v710
      %1786 = vmatprep.subr.mxu0 0.0
      %1787 = vmatpush2.msra.mxu0 %v709
      %1788 = vmatprep.subr.mxu0 0.0
      %1789 = vmatpush2.msra.mxu0 %v708
      %1790 = vmatprep.subr.mxu0 0.0
      %1791 = vmatpush2.msra.mxu0 %v707
      %1792 = vmatprep.subr.mxu0 0.0
      %1793 = vmatpush2.msra.mxu0 %v706
      %1794 = vmatprep.subr.mxu0 0.0
      %1795 = vmatpush2.msra.mxu0 %v705
      %1796 = vmatprep.subr.mxu0 0.0
      %1797 = vmatpush2.msra.mxu0 %v704
      %1798 = vmatprep.subr.mxu0 0.0
      %1799 = vmatpush2.msra.mxu0 %v703
      %1800 = vmatprep.subr.mxu0 0.0
      %1801 = vmatpush2.msra.mxu0 %v702
      %1802 = vmatprep.subr.mxu0 0.0
      %1803 = vmatpush2.msra.mxu0 %v701
      %1804 = vmatprep.subr.mxu0 0.0
      %1805 = vmatpush2.msra.mxu0 %v700
      %1806 = vmatprep.subr.mxu0 0.0
      %1807 = vmatpush2.msra.mxu0 %v699
      %1808 = vmatprep.subr.mxu0 0.0
      %1809 = vmatpush2.msra.mxu0 %v698
      %1810 = vmatprep.mubr.f32.mxu0 %v215
      %1811 = vmatmul.mubr.f32.gmra.mxu0 %v214
      %v1812 = vpop.f32.mrf.mxu0
      %v1813 = vadd.f32 %v1713, %v1812
      %v1814 = vpop.f32.mrf.mxu0
      %1815 = vmatprep.mubr.f32.mxu0 %v239
      %1816 = vmatmul.mubr.f32.gmra.mxu0 %v238
      %v1817 = vpop.f32.mrf.mxu0
      %v1818 = vadd.f32 %v1718, %v1817
      %v1819 = vpop.f32.mrf.mxu0
      %1820 = vmatprep.mubr.f32.mxu0 %v263
      %1821 = vmatmul.mubr.f32.gmra.mxu0 %v262
      %v1822 = vpop.f32.mrf.mxu0
      %v1823 = vadd.f32 %v1723, %v1822
      %v1824 = vpop.f32.mrf.mxu0
      %1825 = vmatprep.mubr.f32.mxu0 %v287
      %1826 = vmatmul.mubr.f32.gmra.mxu0 %v286
      %v1827 = vpop.f32.mrf.mxu0
      %v1828 = vadd.f32 %v1728, %v1827
      %v1829 = vpop.f32.mrf.mxu0
      %1830 = vmatprep.mubr.f32.mxu0 %v311
      %1831 = vmatmul.mubr.f32.gmra.mxu0 %v310
      %v1832 = vpop.f32.mrf.mxu0
      %v1833 = vadd.f32 %v1733, %v1832
      %v1834 = vpop.f32.mrf.mxu0
      %1835 = vmatprep.mubr.f32.mxu0 %v335
      %1836 = vmatmul.mubr.f32.gmra.mxu0 %v334
      %v1837 = vpop.f32.mrf.mxu0
      %v1838 = vadd.f32 %v1738, %v1837
      %v1839 = vpop.f32.mrf.mxu0
      %1840 = vmatprep.mubr.f32.mxu0 %v359
      %1841 = vmatmul.mubr.f32.gmra.mxu0 %v358
      %v1842 = vpop.f32.mrf.mxu0
      %v1843 = vadd.f32 %v1743, %v1842
      %v1844 = vpop.f32.mrf.mxu0
      %1845 = vdwg.mxu0
      %1846 = vmatprep.subr.mxu0 0.0
      %1847 = vmatpush1.msra.mxu0 %v729
      %1848 = vmatprep.subr.mxu0 0.0
      %1849 = vmatpush1.msra.mxu0 %v728
      %1850 = vmatprep.subr.mxu0 0.0
      %1851 = vmatpush1.msra.mxu0 %v727
      %1852 = vmatprep.subr.mxu0 0.0
      %1853 = vmatpush1.msra.mxu0 %v726
      %1854 = vmatprep.subr.mxu0 0.0
      %1855 = vmatpush1.msra.mxu0 %v725
      %1856 = vmatprep.subr.mxu0 0.0
      %1857 = vmatpush1.msra.mxu0 %v724
      %1858 = vmatprep.subr.mxu0 0.0
      %1859 = vmatpush1.msra.mxu0 %v723
      %1860 = vmatprep.subr.mxu0 0.0
      %1861 = vmatpush1.msra.mxu0 %v722
      %1862 = vmatprep.subr.mxu0 0.0
      %1863 = vmatpush1.msra.mxu0 %v721
      %1864 = vmatprep.subr.mxu0 0.0
      %1865 = vmatpush1.msra.mxu0 %v720
      %1866 = vmatprep.subr.mxu0 0.0
      %1867 = vmatpush1.msra.mxu0 %v719
      %1868 = vmatprep.subr.mxu0 0.0
      %1869 = vmatpush1.msra.mxu0 %v718
      %1870 = vmatprep.subr.mxu0 0.0
      %1871 = vmatpush1.msra.mxu0 %v717
      %1872 = vmatprep.subr.mxu0 0.0
      %1873 = vmatpush1.msra.mxu0 %v716
      %1874 = vmatprep.subr.mxu0 0.0
      %1875 = vmatpush1.msra.mxu0 %v715
      %1876 = vmatprep.subr.mxu0 0.0
      %1877 = vmatpush1.msra.mxu0 %v714
      %1878 = vmatprep.subr.mxu0 0.0
      %1879 = vmatpush2.msra.mxu0 %v745
      %1880 = vmatprep.subr.mxu0 0.0
      %1881 = vmatpush2.msra.mxu0 %v744
      %1882 = vmatprep.subr.mxu0 0.0
      %1883 = vmatpush2.msra.mxu0 %v743
      %1884 = vmatprep.subr.mxu0 0.0
      %1885 = vmatpush2.msra.mxu0 %v742
      %1886 = vmatprep.subr.mxu0 0.0
      %1887 = vmatpush2.msra.mxu0 %v741
      %1888 = vmatprep.subr.mxu0 0.0
      %1889 = vmatpush2.msra.mxu0 %v740
      %1890 = vmatprep.subr.mxu0 0.0
      %1891 = vmatpush2.msra.mxu0 %v739
      %1892 = vmatprep.subr.mxu0 0.0
      %1893 = vmatpush2.msra.mxu0 %v738
      %1894 = vmatprep.subr.mxu0 0.0
      %1895 = vmatpush2.msra.mxu0 %v737
      %1896 = vmatprep.subr.mxu0 0.0
      %1897 = vmatpush2.msra.mxu0 %v736
      %1898 = vmatprep.subr.mxu0 0.0
      %1899 = vmatpush2.msra.mxu0 %v735
      %1900 = vmatprep.subr.mxu0 0.0
      %1901 = vmatpush2.msra.mxu0 %v734
      %1902 = vmatprep.subr.mxu0 0.0
      %1903 = vmatpush2.msra.mxu0 %v733
      %1904 = vmatprep.subr.mxu0 0.0
      %1905 = vmatpush2.msra.mxu0 %v732
      %1906 = vmatprep.subr.mxu0 0.0
      %1907 = vmatpush2.msra.mxu0 %v731
      %1908 = vmatprep.subr.mxu0 0.0
      %1909 = vmatpush2.msra.mxu0 %v730
      %1910 = vmatprep.mubr.f32.mxu0 %v217
      %1911 = vmatmul.mubr.f32.gmra.mxu0 %v216
      %v1912 = vpop.f32.mrf.mxu0
      %v1913 = vadd.f32 %v1813, %v1912
      %v1914 = vpop.f32.mrf.mxu0
      %1915 = vmatprep.mubr.f32.mxu0 %v241
      %1916 = vmatmul.mubr.f32.gmra.mxu0 %v240
      %v1917 = vpop.f32.mrf.mxu0
      %v1918 = vadd.f32 %v1818, %v1917
      %v1919 = vpop.f32.mrf.mxu0
      %1920 = vmatprep.mubr.f32.mxu0 %v265
      %1921 = vmatmul.mubr.f32.gmra.mxu0 %v264
      %v1922 = vpop.f32.mrf.mxu0
      %v1923 = vadd.f32 %v1823, %v1922
      %v1924 = vpop.f32.mrf.mxu0
      %1925 = vmatprep.mubr.f32.mxu0 %v289
      %1926 = vmatmul.mubr.f32.gmra.mxu0 %v288
      %v1927 = vpop.f32.mrf.mxu0
      %v1928 = vadd.f32 %v1828, %v1927
      %v1929 = vpop.f32.mrf.mxu0
      %1930 = vmatprep.mubr.f32.mxu0 %v313
      %1931 = vmatmul.mubr.f32.gmra.mxu0 %v312
      %v1932 = vpop.f32.mrf.mxu0
      %v1933 = vadd.f32 %v1833, %v1932
      %v1934 = vpop.f32.mrf.mxu0
      %1935 = vmatprep.mubr.f32.mxu0 %v337
      %1936 = vmatmul.mubr.f32.gmra.mxu0 %v336
      %v1937 = vpop.f32.mrf.mxu0
      %v1938 = vadd.f32 %v1838, %v1937
      %v1939 = vpop.f32.mrf.mxu0
      %1940 = vmatprep.mubr.f32.mxu0 %v361
      %1941 = vmatmul.mubr.f32.gmra.mxu0 %v360
      %v1942 = vpop.f32.mrf.mxu0
      %v1943 = vadd.f32 %v1843, %v1942
      %v1944 = vpop.f32.mrf.mxu0
      %1945 = vdwg.mxu0
      %v1946 = vadd.f32 %v1913, %v1918
      %v1947 = vadd.f32 %v1946, %v1923
      %v1948 = vadd.f32 %v1947, %v1928
      %v1949 = vadd.f32 %v1948, %v1933
      %v1950 = vadd.f32 %v1949, %v1938
      %vm1951 = vcmask 1040384
      %v1952 = vsel %vm1951, %v1943, 0.0
      %v1953 = vadd.f32 %v1950, %v1952
      %v1954 = vrot.slane %v1953, 4
      %v1955 = vadd.f32 %v1953, %v1954
      %v1956 = vrot.slane %v1955, 2
      %v1957 = vadd.f32 %v1955, %v1956
      %v1958 = vrot.slane %v1957, 1
      %v1959 = vadd.f32 %v1957, %v1958
      %v1960 = vmul.f32 %v1959, 0.020408163
      %v1961 = vld [vmem:[%s2] sm:$0x1]
      %v1962 = vadd.f32 %v1960, %v1961
      %v1963 = vmul.f32 %v1962, %v1962
      %v1964 = vsel %vm1951, %v1963, 0.0
      %1965 = vadd.xlane.f32.xlu0 %v1964
      %v1966 = vpop.xlane.xlu0 %1965
      %v1967 = vrsqrt.pop %v1966
      %v1968 = vmul.f32 %v1962, %v1967
      %v1969 = vld [vmem:[%s3] sm:$0xff]
      %v1970 = vld [vmem:[%s3 + $0x8] sm:$0xff]
      %v1971 = vld [vmem:[%s3 + $0x10] sm:$0xff]
      %v1972 = vld [vmem:[%s3 + $0x18] sm:$0xff]
      %v1973 = vld [vmem:[%s3 + $0x20] sm:$0xff]
      %v1974 = vld [vmem:[%s3 + $0x28] sm:$0xff]
      %v1975 = vld [vmem:[%s3 + $0x30] sm:$0xff]
      %v1976 = vld [vmem:[%s3 + $0x38] sm:$0xff]
      %v1977 = vld [vmem:[%s3 + $0x40] sm:$0xff]
      %v1978 = vld [vmem:[%s3 + $0x48] sm:$0xff]
      %v1979 = vld [vmem:[%s3 + $0x50] sm:$0xff]
      %v1980 = vld [vmem:[%s3 + $0x58] sm:$0xff]
      %v1981 = vld [vmem:[%s3 + $0x60] sm:$0xff]
      %v1982 = vld [vmem:[%s3 + $0x68] sm:$0xff]
      %v1983 = vld [vmem:[%s3 + $0x70] sm:$0xff]
      %v1984 = vld [vmem:[%s3 + $0x78] sm:$0xff]
      %1985 = vmatprep.subr.mxu0 0.0
      %1986 = vmatpush1.msra.mxu0 %v1984
      %1987 = vmatprep.subr.mxu0 0.0
      %1988 = vmatpush1.msra.mxu0 %v1983
      %1989 = vmatprep.subr.mxu0 0.0
      %1990 = vmatpush1.msra.mxu0 %v1982
      %1991 = vmatprep.subr.mxu0 0.0
      %1992 = vmatpush1.msra.mxu0 %v1981
      %1993 = vmatprep.subr.mxu0 0.0
      %1994 = vmatpush1.msra.mxu0 %v1980
      %1995 = vmatprep.subr.mxu0 0.0
      %1996 = vmatpush1.msra.mxu0 %v1979
      %1997 = vmatprep.subr.mxu0 0.0
      %1998 = vmatpush1.msra.mxu0 %v1978
      %1999 = vmatprep.subr.mxu0 0.0
      %2000 = vmatpush1.msra.mxu0 %v1977
      %2001 = vmatprep.subr.mxu0 0.0
      %2002 = vmatpush1.msra.mxu0 %v1976
      %2003 = vmatprep.subr.mxu0 0.0
      %2004 = vmatpush1.msra.mxu0 %v1975
      %2005 = vmatprep.subr.mxu0 0.0
      %2006 = vmatpush1.msra.mxu0 %v1974
      %2007 = vmatprep.subr.mxu0 0.0
      %2008 = vmatpush1.msra.mxu0 %v1973
      %2009 = vmatprep.subr.mxu0 0.0
      %2010 = vmatpush1.msra.mxu0 %v1972
      %2011 = vmatprep.subr.mxu0 0.0
      %2012 = vmatpush1.msra.mxu0 %v1971
      %2013 = vmatprep.subr.mxu0 0.0
      %2014 = vmatpush1.msra.mxu0 %v1970
      %2015 = vmatprep.subr.mxu0 0.0
      %2016 = vmatpush1.msra.mxu0 %v1969
      %2017 = vmatprep.subr.mxu0 0.0
      %2018 = vmatpush2.msra.mxu0 0.0
      %2019 = vmatprep.subr.mxu0 0.0
      %2020 = vmatpush2.msra.mxu0 0.0
      %2021 = vmatprep.subr.mxu0 0.0
      %2022 = vmatpush2.msra.mxu0 0.0
      %2023 = vmatprep.subr.mxu0 0.0
      %2024 = vmatpush2.msra.mxu0 0.0
      %2025 = vmatprep.subr.mxu0 0.0
      %2026 = vmatpush2.msra.mxu0 0.0
      %2027 = vmatprep.subr.mxu0 0.0
      %2028 = vmatpush2.msra.mxu0 0.0
      %2029 = vmatprep.subr.mxu0 0.0
      %2030 = vmatpush2.msra.mxu0 0.0
      %2031 = vmatprep.subr.mxu0 0.0
      %2032 = vmatpush2.msra.mxu0 0.0
      %2033 = vmatprep.subr.mxu0 0.0
      %2034 = vmatpush2.msra.mxu0 0.0
      %2035 = vmatprep.subr.mxu0 0.0
      %2036 = vmatpush2.msra.mxu0 0.0
      %2037 = vmatprep.subr.mxu0 0.0
      %2038 = vmatpush2.msra.mxu0 0.0
      %2039 = vmatprep.subr.mxu0 0.0
      %2040 = vmatpush2.msra.mxu0 0.0
      %2041 = vmatprep.subr.mxu0 0.0
      %2042 = vmatpush2.msra.mxu0 0.0
      %2043 = vmatprep.subr.mxu0 0.0
      %2044 = vmatpush2.msra.mxu0 0.0
      %2045 = vmatprep.subr.mxu0 0.0
      %2046 = vmatpush2.msra.mxu0 0.0
      %2047 = vmatprep.subr.mxu0 0.0
      %2048 = vmatpush2.msra.mxu0 0.0
      %2049 = vmatprep.mubr.f32.mxu0 0.0
      %2050 = vmatmul.mubr.f32.gmra.mxu0 %v1968
      %v2051 = vpop.f32.mrf.mxu0
      %v2052 = vadd.f32 0.0, %v2051
      %v2053 = vpop.f32.mrf.mxu0
      %2054 = vdwg.mxu0
      %vm2055 = vcmask 57344
      %v2056 = vsel %vm2055, %v2052, -inf
      %2057 = vmax.xlane.f32.xlu0 %v2056
      %v2058 = vpop.xlane.xlu0 %2057
      %v2059 = vsub.f32 %v2052, %v2058
      %v2060 = vmul.f32 %v2059, 1.442695
      %v2061 = vpow.pop %v2060
      %v2062 = vsel %vm2055, %v2061, 0.0
      %2063 = vadd.xlane.f32.xlu0 %v2062
      %v2064 = vpop.xlane.xlu0 %2063
      %v2065 = vrcp.pop %v2064
      %v2066 = vmul.f32 %v2061, %v2065
      %2068 = vset.pattern.permute.xlu0 0
      %2069 = vperm.xlu0 %2068, %v2066
      %v2070 = vpop.permute.xlu0 %2069
      %2072 = vst [vmem:[%s193] sm:$0x1] %v2070
      %p2073 = scmp.lt.s32.totalorder %s15, 1
      %s2074 = scalar_select %p2073, %s15, 1
      %s2075 = scalar_lea.vmem %s4, %s2074
      // Predicated region
      $region37: #{l_clip_from_feature.1} parent=35 // pred_check
        %p2076 = pneg %p122
      $region38: #{l_clip_from_feature.1} parent=35 // pred_check_branch
        %2078 = sbr.rel (%p2076) target = $region40
      $region39: #{l_clip_from_feature.1} parent=35 // pred_region
        _
      $region40: #{l_clip_from_feature.1} parent=35 // pred_fallthru
        _
    $region36: #{l_clip_from_feature.1} parent=5 // pred_fallthru
      _
    %p2079 = scmp.le.s32.totalorder 2, %s10
    // Predicated region
    $region41: #{l_clip_from_feature.1} parent=5 // pred_check
      %p2080 = pneg %p2079
    $region42: #{l_clip_from_feature.1} parent=5 // pred_check_branch
      %2082 = sbr.rel (%p2080) target = $region44
    $region43: #{l_clip_from_feature.1} parent=5 // pred_region
      %s2083 = ssub.s32 %s10, 2
      // Predicated region
      $region45: #{l_clip_from_feature.1} parent=43 // pred_check
        %p2084 = pneg %p128
      $region46: #{l_clip_from_feature.1} parent=43 // pred_check_branch
        %2086 = sbr.rel (%p2084) target = $region48
      $region47: #{l_clip_from_feature.1} parent=43 // pred_region
        %p2087 = scmp.lt.s32.totalorder %s16, 1
        %s2088 = scalar_select %p2087, %s16, 1
        %s2089 = scalar_lea.vmem %s4, %s2088
      $region48: #{l_clip_from_feature.1} parent=43 // pred_fallthru
        _
    $region44: #{l_clip_from_feature.1} parent=5 // pred_fallthru
      _
  $region6: #{l_clip_from_feature.1} parent=0 // loop_footer
    %s14 = sadd.s32 1, %s10
  $region7: #{l_clip_from_feature.1} parent=0 // loop_footer_branch
    %9 = sbr.rel target = $region3
  $region8: #{l_clip_from_feature.1} parent=0 // loop_exit
    _

</llo_original>
